<compile_context>
chip_gen: v6e
topology: v6e:2x2x1
jax: 0.10.0
libtpu: 0.0.40
codegen_flags: <defaults>
</compile_context>

<pallas_src>
import functools

import jax
import jax.numpy as jnp
from jax import lax
from jax.experimental import pallas as pl
from jax.experimental.pallas import tpu as pltpu

T = 30
HIDDEN_DIM = 64


def _rnn_kernel(x_ref, wih_t_ref, whh_t_ref, b_ref, wfc_t_ref, bfc_ref,
                out_ref, h_all, *, num_steps):
    # All tiles are tiny and VMEM-resident; load once into vregs.
    x = x_ref[...]          # (B, D_in)
    wih_t = wih_t_ref[...]  # (D_in, H)   pre-transposed in wrapper
    whh_t = whh_t_ref[...]  # (H, H)      pre-transposed in wrapper
    b = b_ref[...]          # (1, H)      = b_ih + b_hh (pre-summed in wrapper)
    wfc_t = wfc_t_ref[...]  # (H, O)      pre-transposed in wrapper
    bfc = bfc_ref[...]      # (1, O)

    B = x.shape[0]
    H = whh_t.shape[0]

    # Input contribution is identical at every timestep (x repeated along T),
    # so compute it once: (B, H).
    x_contrib = jnp.dot(x, wih_t, preferred_element_type=jnp.float32) + b

    # Recurrence: h kept in registers; fully unrolled (num_steps is static).
    # Only a cheap static-slice store of h_t per step (off the serial chain).
    h = jnp.zeros((B, H), jnp.float32)
    for t in range(num_steps):
        h = jnp.tanh(
            x_contrib + jnp.dot(h, whh_t, preferred_element_type=jnp.float32))
        h_all[pl.ds(t * B, B), :] = h

    # FC head hoisted out of the loop: one (T*B, H) @ (H, O) matmul + bias,
    # then one contiguous slab store of the whole (T*B, O) result.
    y = jnp.dot(h_all[...], wfc_t, preferred_element_type=jnp.float32) + bfc
    out_ref[...] = y.astype(out_ref.dtype)


def rnn_forward(x, params, num_steps):
    """x: (B, D_in) float32 -> (B, num_steps, O) float32."""
    w_ih, w_hh, b_ih, b_hh, w_fc, b_fc = params
    B, _ = x.shape
    H = w_hh.shape[0]
    O = w_fc.shape[0]

    vmem = pl.BlockSpec(memory_space=pltpu.MemorySpace.VMEM)
    kernel = functools.partial(_rnn_kernel, num_steps=num_steps)

    out_flat = pl.pallas_call(
        kernel,
        out_shape=jax.ShapeDtypeStruct((num_steps * B, O), jnp.float32),
        in_specs=[vmem] * 6,
        out_specs=vmem,
        scratch_shapes=[pltpu.VMEM((num_steps * B, H), jnp.float32)],
    )(
        x,
        w_ih.T,                      # (D_in, H)
        w_hh.T,                      # (H, H)
        (b_ih + b_hh)[None, :],      # (1, H)
        w_fc.T,                      # (H, O)
        b_fc[None, :],               # (1, O)
    )
    # (T*B, O) -> (T, B, O) -> (B, T, O): wrapper-side layout plumbing (XLA, tiny).
    return jnp.transpose(out_flat.reshape(num_steps, B, O), (1, 0, 2))


def make_params(key, input_dim, hidden_dim, output_dim):
    """Deterministic parameter init mirroring the module's __init__."""
    k1, k2, k3, k4, k5, k6 = jax.random.split(key, 6)
    # nn.init.uniform_(-0.5, 0.5) for all RNN weights & biases
    w_ih = jax.random.uniform(k1, (hidden_dim, input_dim), jnp.float32, -0.5, 0.5)
    w_hh = jax.random.uniform(k2, (hidden_dim, hidden_dim), jnp.float32, -0.5, 0.5)
    b_ih = jax.random.uniform(k3, (hidden_dim,), jnp.float32, -0.5, 0.5)
    b_hh = jax.random.uniform(k4, (hidden_dim,), jnp.float32, -0.5, 0.5)
    # nn.Linear default init: U(-1/sqrt(fan_in), 1/sqrt(fan_in))
    bound = 1.0 / jnp.sqrt(hidden_dim)
    w_fc = jax.random.uniform(k5, (output_dim, hidden_dim), jnp.float32, -bound, bound)
    b_fc = jax.random.uniform(k6, (output_dim,), jnp.float32, -bound, bound)
    return (w_ih, w_hh, b_ih, b_hh, w_fc, b_fc)


def rnn_forward_ref(x, params, num_steps):
    """Pure-JAX reference (lax.scan) for correctness check."""
    w_ih, w_hh, b_ih, b_hh, w_fc, b_fc = params
    B = x.shape[0]
    xc = x @ w_ih.T + b_ih + b_hh

    def step(h, _):
        h = jnp.tanh(xc + h @ w_hh.T)
        return h, h @ w_fc.T + b_fc

    _, ys = lax.scan(step, jnp.zeros((B, HIDDEN_DIM), jnp.float32),
                     None, length=num_steps)
    return jnp.transpose(ys, (1, 0, 2))   # (B, T, O)


if __name__ == "__main__":
    key = jax.random.PRNGKey(0)
    kx, kp = jax.random.split(key)

    batch = 4
    input_dim = 16
    output_dim = 8

    x = jax.random.normal(kx, (batch, input_dim), jnp.float32)
    params = make_params(kp, input_dim, HIDDEN_DIM, output_dim)

    out = rnn_forward(x, params, T)
    out = jax.block_until_ready(out)

    ref = rnn_forward_ref(x, params, T)
    assert out.shape == (batch, T, output_dim)
    assert jnp.allclose(out, ref, atol=1e-4, rtol=1e-4)

    print("KERNEL_OK")
</pallas_src>

<mosaic_0001>
module attributes {stable_mosaic.version = 11 : i64} {
  func.func @_rnn_kernel(%arg0: memref<4x16xf32, #tpu.memory_space<vmem>>, %arg1: memref<16x64xf32, #tpu.memory_space<vmem>>, %arg2: memref<64x64xf32, #tpu.memory_space<vmem>>, %arg3: memref<1x64xf32, #tpu.memory_space<vmem>>, %arg4: memref<64x8xf32, #tpu.memory_space<vmem>>, %arg5: memref<1x8xf32, #tpu.memory_space<vmem>>, %arg6: memref<120x8xf32, #tpu.memory_space<vmem>>, %arg7: memref<120x64xf32, #tpu.memory_space<vmem>>) attributes {dimension_semantics = [], scalar_prefetch = 0 : i64, scratch_operands = 1 : i64, tpu.core_type = #tpu.core_type<tc>} {
    %c0 = arith.constant 0 : index
    %c0_0 = arith.constant 0 : index
    %0 = vector.load %arg0[%c0, %c0_0] : memref<4x16xf32, #tpu.memory_space<vmem>>, vector<4x16xf32>
    %c0_1 = arith.constant 0 : index
    %c0_2 = arith.constant 0 : index
    %1 = vector.load %arg1[%c0_1, %c0_2] : memref<16x64xf32, #tpu.memory_space<vmem>>, vector<16x64xf32>
    %c0_3 = arith.constant 0 : index
    %c0_4 = arith.constant 0 : index
    %2 = vector.load %arg2[%c0_3, %c0_4] : memref<64x64xf32, #tpu.memory_space<vmem>>, vector<64x64xf32>
    %c0_5 = arith.constant 0 : index
    %c0_6 = arith.constant 0 : index
    %3 = vector.load %arg3[%c0_5, %c0_6] : memref<1x64xf32, #tpu.memory_space<vmem>>, vector<1x64xf32>
    %c0_7 = arith.constant 0 : index
    %c0_8 = arith.constant 0 : index
    %4 = vector.load %arg4[%c0_7, %c0_8] : memref<64x8xf32, #tpu.memory_space<vmem>>, vector<64x8xf32>
    %c0_9 = arith.constant 0 : index
    %c0_10 = arith.constant 0 : index
    %5 = vector.load %arg5[%c0_9, %c0_10] : memref<1x8xf32, #tpu.memory_space<vmem>>, vector<1x8xf32>
    %cst = arith.constant dense<0.000000e+00> : vector<4x64xf32>
    %6 = tpu.matmul %0, %1, %cst {dimension_numbers = #tpu.dot_dimension_numbers<[1], [0], [0], [1], [0, 0, 1, 1], [], []>} : vector<4x16xf32>, vector<16x64xf32>, vector<4x64xf32> -> vector<4x64xf32>
    %7 = vector.broadcast %3 : vector<1x64xf32> to vector<4x64xf32>
    %8 = arith.addf %6, %7 : vector<4x64xf32>
    %cst_11 = arith.constant 0.000000e+00 : f32
    %9 = vector.broadcast %cst_11 : f32 to vector<4x64xf32>
    %cst_12 = arith.constant dense<0.000000e+00> : vector<4x64xf32>
    %10 = tpu.matmul %9, %2, %cst_12 {dimension_numbers = #tpu.dot_dimension_numbers<[1], [0], [0], [1], [0, 0, 1, 1], [], []>} : vector<4x64xf32>, vector<64x64xf32>, vector<4x64xf32> -> vector<4x64xf32>
    %11 = arith.addf %8, %10 : vector<4x64xf32>
    %12 = math.tanh %11 : vector<4x64xf32>
    %c0_13 = arith.constant 0 : index
    %c0_14 = arith.constant 0 : index
    %13 = vector.load %arg7[%c0_13, %c0_14] : memref<120x64xf32, #tpu.memory_space<vmem>>, vector<4x64xf32>
    tpu.vector_store %arg7[%c0_13, %c0_14], %12 {strides = array<i32>} : memref<120x64xf32, #tpu.memory_space<vmem>>, vector<4x64xf32>,
    %cst_15 = arith.constant dense<0.000000e+00> : vector<4x64xf32>
    %14 = tpu.matmul %12, %2, %cst_15 {dimension_numbers = #tpu.dot_dimension_numbers<[1], [0], [0], [1], [0, 0, 1, 1], [], []>} : vector<4x64xf32>, vector<64x64xf32>, vector<4x64xf32> -> vector<4x64xf32>
    %15 = arith.addf %8, %14 : vector<4x64xf32>
    %16 = math.tanh %15 : vector<4x64xf32>
    %c4 = arith.constant 4 : index
    %c0_16 = arith.constant 0 : index
    %17 = vector.load %arg7[%c4, %c0_16] : memref<120x64xf32, #tpu.memory_space<vmem>>, vector<4x64xf32>
    tpu.vector_store %arg7[%c4, %c0_16], %16 {strides = array<i32>} : memref<120x64xf32, #tpu.memory_space<vmem>>, vector<4x64xf32>,
    %cst_17 = arith.constant dense<0.000000e+00> : vector<4x64xf32>
    %18 = tpu.matmul %16, %2, %cst_17 {dimension_numbers = #tpu.dot_dimension_numbers<[1], [0], [0], [1], [0, 0, 1, 1], [], []>} : vector<4x64xf32>, vector<64x64xf32>, vector<4x64xf32> -> vector<4x64xf32>
    %19 = arith.addf %8, %18 : vector<4x64xf32>
    %20 = math.tanh %19 : vector<4x64xf32>
    %c8 = arith.constant 8 : index
    %c0_18 = arith.constant 0 : index
    %21 = vector.load %arg7[%c8, %c0_18] : memref<120x64xf32, #tpu.memory_space<vmem>>, vector<4x64xf32>
    tpu.vector_store %arg7[%c8, %c0_18], %20 {strides = array<i32>} : memref<120x64xf32, #tpu.memory_space<vmem>>, vector<4x64xf32>,
    %cst_19 = arith.constant dense<0.000000e+00> : vector<4x64xf32>
    %22 = tpu.matmul %20, %2, %cst_19 {dimension_numbers = #tpu.dot_dimension_numbers<[1], [0], [0], [1], [0, 0, 1, 1], [], []>} : vector<4x64xf32>, vector<64x64xf32>, vector<4x64xf32> -> vector<4x64xf32>
    %23 = arith.addf %8, %22 : vector<4x64xf32>
    %24 = math.tanh %23 : vector<4x64xf32>
    %c12 = arith.constant 12 : index
    %c0_20 = arith.constant 0 : index
    %25 = vector.load %arg7[%c12, %c0_20] : memref<120x64xf32, #tpu.memory_space<vmem>>, vector<4x64xf32>
    tpu.vector_store %arg7[%c12, %c0_20], %24 {strides = array<i32>} : memref<120x64xf32, #tpu.memory_space<vmem>>, vector<4x64xf32>,
    %cst_21 = arith.constant dense<0.000000e+00> : vector<4x64xf32>
    %26 = tpu.matmul %24, %2, %cst_21 {dimension_numbers = #tpu.dot_dimension_numbers<[1], [0], [0], [1], [0, 0, 1, 1], [], []>} : vector<4x64xf32>, vector<64x64xf32>, vector<4x64xf32> -> vector<4x64xf32>
    %27 = arith.addf %8, %26 : vector<4x64xf32>
    %28 = math.tanh %27 : vector<4x64xf32>
    %c16 = arith.constant 16 : index
    %c0_22 = arith.constant 0 : index
    %29 = vector.load %arg7[%c16, %c0_22] : memref<120x64xf32, #tpu.memory_space<vmem>>, vector<4x64xf32>
    tpu.vector_store %arg7[%c16, %c0_22], %28 {strides = array<i32>} : memref<120x64xf32, #tpu.memory_space<vmem>>, vector<4x64xf32>,
    %cst_23 = arith.constant dense<0.000000e+00> : vector<4x64xf32>
    %30 = tpu.matmul %28, %2, %cst_23 {dimension_numbers = #tpu.dot_dimension_numbers<[1], [0], [0], [1], [0, 0, 1, 1], [], []>} : vector<4x64xf32>, vector<64x64xf32>, vector<4x64xf32> -> vector<4x64xf32>
    %31 = arith.addf %8, %30 : vector<4x64xf32>
    %32 = math.tanh %31 : vector<4x64xf32>
    %c20 = arith.constant 20 : index
    %c0_24 = arith.constant 0 : index
    %33 = vector.load %arg7[%c20, %c0_24] : memref<120x64xf32, #tpu.memory_space<vmem>>, vector<4x64xf32>
    tpu.vector_store %arg7[%c20, %c0_24], %32 {strides = array<i32>} : memref<120x64xf32, #tpu.memory_space<vmem>>, vector<4x64xf32>,
    %cst_25 = arith.constant dense<0.000000e+00> : vector<4x64xf32>
    %34 = tpu.matmul %32, %2, %cst_25 {dimension_numbers = #tpu.dot_dimension_numbers<[1], [0], [0], [1], [0, 0, 1, 1], [], []>} : vector<4x64xf32>, vector<64x64xf32>, vector<4x64xf32> -> vector<4x64xf32>
    %35 = arith.addf %8, %34 : vector<4x64xf32>
    %36 = math.tanh %35 : vector<4x64xf32>
    %c24 = arith.constant 24 : index
    %c0_26 = arith.constant 0 : index
    %37 = vector.load %arg7[%c24, %c0_26] : memref<120x64xf32, #tpu.memory_space<vmem>>, vector<4x64xf32>
    tpu.vector_store %arg7[%c24, %c0_26], %36 {strides = array<i32>} : memref<120x64xf32, #tpu.memory_space<vmem>>, vector<4x64xf32>,
    %cst_27 = arith.constant dense<0.000000e+00> : vector<4x64xf32>
    %38 = tpu.matmul %36, %2, %cst_27 {dimension_numbers = #tpu.dot_dimension_numbers<[1], [0], [0], [1], [0, 0, 1, 1], [], []>} : vector<4x64xf32>, vector<64x64xf32>, vector<4x64xf32> -> vector<4x64xf32>
    %39 = arith.addf %8, %38 : vector<4x64xf32>
    %40 = math.tanh %39 : vector<4x64xf32>
    %c28 = arith.constant 28 : index
    %c0_28 = arith.constant 0 : index
    %41 = vector.load %arg7[%c28, %c0_28] : memref<120x64xf32, #tpu.memory_space<vmem>>, vector<4x64xf32>
    tpu.vector_store %arg7[%c28, %c0_28], %40 {strides = array<i32>} : memref<120x64xf32, #tpu.memory_space<vmem>>, vector<4x64xf32>,
    %cst_29 = arith.constant dense<0.000000e+00> : vector<4x64xf32>
    %42 = tpu.matmul %40, %2, %cst_29 {dimension_numbers = #tpu.dot_dimension_numbers<[1], [0], [0], [1], [0, 0, 1, 1], [], []>} : vector<4x64xf32>, vector<64x64xf32>, vector<4x64xf32> -> vector<4x64xf32>
    %43 = arith.addf %8, %42 : vector<4x64xf32>
    %44 = math.tanh %43 : vector<4x64xf32>
    %c32 = arith.constant 32 : index
    %c0_30 = arith.constant 0 : index
    %45 = vector.load %arg7[%c32, %c0_30] : memref<120x64xf32, #tpu.memory_space<vmem>>, vector<4x64xf32>
    tpu.vector_store %arg7[%c32, %c0_30], %44 {strides = array<i32>} : memref<120x64xf32, #tpu.memory_space<vmem>>, vector<4x64xf32>,
    %cst_31 = arith.constant dense<0.000000e+00> : vector<4x64xf32>
    %46 = tpu.matmul %44, %2, %cst_31 {dimension_numbers = #tpu.dot_dimension_numbers<[1], [0], [0], [1], [0, 0, 1, 1], [], []>} : vector<4x64xf32>, vector<64x64xf32>, vector<4x64xf32> -> vector<4x64xf32>
    %47 = arith.addf %8, %46 : vector<4x64xf32>
    %48 = math.tanh %47 : vector<4x64xf32>
    %c36 = arith.constant 36 : index
    %c0_32 = arith.constant 0 : index
    %49 = vector.load %arg7[%c36, %c0_32] : memref<120x64xf32, #tpu.memory_space<vmem>>, vector<4x64xf32>
    tpu.vector_store %arg7[%c36, %c0_32], %48 {strides = array<i32>} : memref<120x64xf32, #tpu.memory_space<vmem>>, vector<4x64xf32>,
    %cst_33 = arith.constant dense<0.000000e+00> : vector<4x64xf32>
    %50 = tpu.matmul %48, %2, %cst_33 {dimension_numbers = #tpu.dot_dimension_numbers<[1], [0], [0], [1], [0, 0, 1, 1], [], []>} : vector<4x64xf32>, vector<64x64xf32>, vector<4x64xf32> -> vector<4x64xf32>
    %51 = arith.addf %8, %50 : vector<4x64xf32>
    %52 = math.tanh %51 : vector<4x64xf32>
    %c40 = arith.constant 40 : index
    %c0_34 = arith.constant 0 : index
    %53 = vector.load %arg7[%c40, %c0_34] : memref<120x64xf32, #tpu.memory_space<vmem>>, vector<4x64xf32>
    tpu.vector_store %arg7[%c40, %c0_34], %52 {strides = array<i32>} : memref<120x64xf32, #tpu.memory_space<vmem>>, vector<4x64xf32>,
    %cst_35 = arith.constant dense<0.000000e+00> : vector<4x64xf32>
    %54 = tpu.matmul %52, %2, %cst_35 {dimension_numbers = #tpu.dot_dimension_numbers<[1], [0], [0], [1], [0, 0, 1, 1], [], []>} : vector<4x64xf32>, vector<64x64xf32>, vector<4x64xf32> -> vector<4x64xf32>
    %55 = arith.addf %8, %54 : vector<4x64xf32>
    %56 = math.tanh %55 : vector<4x64xf32>
    %c44 = arith.constant 44 : index
    %c0_36 = arith.constant 0 : index
    %57 = vector.load %arg7[%c44, %c0_36] : memref<120x64xf32, #tpu.memory_space<vmem>>, vector<4x64xf32>
    tpu.vector_store %arg7[%c44, %c0_36], %56 {strides = array<i32>} : memref<120x64xf32, #tpu.memory_space<vmem>>, vector<4x64xf32>,
    %cst_37 = arith.constant dense<0.000000e+00> : vector<4x64xf32>
    %58 = tpu.matmul %56, %2, %cst_37 {dimension_numbers = #tpu.dot_dimension_numbers<[1], [0], [0], [1], [0, 0, 1, 1], [], []>} : vector<4x64xf32>, vector<64x64xf32>, vector<4x64xf32> -> vector<4x64xf32>
    %59 = arith.addf %8, %58 : vector<4x64xf32>
    %60 = math.tanh %59 : vector<4x64xf32>
    %c48 = arith.constant 48 : index
    %c0_38 = arith.constant 0 : index
    %61 = vector.load %arg7[%c48, %c0_38] : memref<120x64xf32, #tpu.memory_space<vmem>>, vector<4x64xf32>
    tpu.vector_store %arg7[%c48, %c0_38], %60 {strides = array<i32>} : memref<120x64xf32, #tpu.memory_space<vmem>>, vector<4x64xf32>,
    %cst_39 = arith.constant dense<0.000000e+00> : vector<4x64xf32>
    %62 = tpu.matmul %60, %2, %cst_39 {dimension_numbers = #tpu.dot_dimension_numbers<[1], [0], [0], [1], [0, 0, 1, 1], [], []>} : vector<4x64xf32>, vector<64x64xf32>, vector<4x64xf32> -> vector<4x64xf32>
    %63 = arith.addf %8, %62 : vector<4x64xf32>
    %64 = math.tanh %63 : vector<4x64xf32>
    %c52 = arith.constant 52 : index
    %c0_40 = arith.constant 0 : index
    %65 = vector.load %arg7[%c52, %c0_40] : memref<120x64xf32, #tpu.memory_space<vmem>>, vector<4x64xf32>
    tpu.vector_store %arg7[%c52, %c0_40], %64 {strides = array<i32>} : memref<120x64xf32, #tpu.memory_space<vmem>>, vector<4x64xf32>,
    %cst_41 = arith.constant dense<0.000000e+00> : vector<4x64xf32>
    %66 = tpu.matmul %64, %2, %cst_41 {dimension_numbers = #tpu.dot_dimension_numbers<[1], [0], [0], [1], [0, 0, 1, 1], [], []>} : vector<4x64xf32>, vector<64x64xf32>, vector<4x64xf32> -> vector<4x64xf32>
    %67 = arith.addf %8, %66 : vector<4x64xf32>
    %68 = math.tanh %67 : vector<4x64xf32>
    %c56 = arith.constant 56 : index
    %c0_42 = arith.constant 0 : index
    %69 = vector.load %arg7[%c56, %c0_42] : memref<120x64xf32, #tpu.memory_space<vmem>>, vector<4x64xf32>
    tpu.vector_store %arg7[%c56, %c0_42], %68 {strides = array<i32>} : memref<120x64xf32, #tpu.memory_space<vmem>>, vector<4x64xf32>,
    %cst_43 = arith.constant dense<0.000000e+00> : vector<4x64xf32>
    %70 = tpu.matmul %68, %2, %cst_43 {dimension_numbers = #tpu.dot_dimension_numbers<[1], [0], [0], [1], [0, 0, 1, 1], [], []>} : vector<4x64xf32>, vector<64x64xf32>, vector<4x64xf32> -> vector<4x64xf32>
    %71 = arith.addf %8, %70 : vector<4x64xf32>
    %72 = math.tanh %71 : vector<4x64xf32>
    %c60 = arith.constant 60 : index
    %c0_44 = arith.constant 0 : index
    %73 = vector.load %arg7[%c60, %c0_44] : memref<120x64xf32, #tpu.memory_space<vmem>>, vector<4x64xf32>
    tpu.vector_store %arg7[%c60, %c0_44], %72 {strides = array<i32>} : memref<120x64xf32, #tpu.memory_space<vmem>>, vector<4x64xf32>,
    %cst_45 = arith.constant dense<0.000000e+00> : vector<4x64xf32>
    %74 = tpu.matmul %72, %2, %cst_45 {dimension_numbers = #tpu.dot_dimension_numbers<[1], [0], [0], [1], [0, 0, 1, 1], [], []>} : vector<4x64xf32>, vector<64x64xf32>, vector<4x64xf32> -> vector<4x64xf32>
    %75 = arith.addf %8, %74 : vector<4x64xf32>
    %76 = math.tanh %75 : vector<4x64xf32>
    %c64 = arith.constant 64 : index
    %c0_46 = arith.constant 0 : index
    %77 = vector.load %arg7[%c64, %c0_46] : memref<120x64xf32, #tpu.memory_space<vmem>>, vector<4x64xf32>
    tpu.vector_store %arg7[%c64, %c0_46], %76 {strides = array<i32>} : memref<120x64xf32, #tpu.memory_space<vmem>>, vector<4x64xf32>,
    %cst_47 = arith.constant dense<0.000000e+00> : vector<4x64xf32>
    %78 = tpu.matmul %76, %2, %cst_47 {dimension_numbers = #tpu.dot_dimension_numbers<[1], [0], [0], [1], [0, 0, 1, 1], [], []>} : vector<4x64xf32>, vector<64x64xf32>, vector<4x64xf32> -> vector<4x64xf32>
    %79 = arith.addf %8, %78 : vector<4x64xf32>
    %80 = math.tanh %79 : vector<4x64xf32>
    %c68 = arith.constant 68 : index
    %c0_48 = arith.constant 0 : index
    %81 = vector.load %arg7[%c68, %c0_48] : memref<120x64xf32, #tpu.memory_space<vmem>>, vector<4x64xf32>
    tpu.vector_store %arg7[%c68, %c0_48], %80 {strides = array<i32>} : memref<120x64xf32, #tpu.memory_space<vmem>>, vector<4x64xf32>,
    %cst_49 = arith.constant dense<0.000000e+00> : vector<4x64xf32>
    %82 = tpu.matmul %80, %2, %cst_49 {dimension_numbers = #tpu.dot_dimension_numbers<[1], [0], [0], [1], [0, 0, 1, 1], [], []>} : vector<4x64xf32>, vector<64x64xf32>, vector<4x64xf32> -> vector<4x64xf32>
    %83 = arith.addf %8, %82 : vector<4x64xf32>
    %84 = math.tanh %83 : vector<4x64xf32>
    %c72 = arith.constant 72 : index
    %c0_50 = arith.constant 0 : index
    %85 = vector.load %arg7[%c72, %c0_50] : memref<120x64xf32, #tpu.memory_space<vmem>>, vector<4x64xf32>
    tpu.vector_store %arg7[%c72, %c0_50], %84 {strides = array<i32>} : memref<120x64xf32, #tpu.memory_space<vmem>>, vector<4x64xf32>,
    %cst_51 = arith.constant dense<0.000000e+00> : vector<4x64xf32>
    %86 = tpu.matmul %84, %2, %cst_51 {dimension_numbers = #tpu.dot_dimension_numbers<[1], [0], [0], [1], [0, 0, 1, 1], [], []>} : vector<4x64xf32>, vector<64x64xf32>, vector<4x64xf32> -> vector<4x64xf32>
    %87 = arith.addf %8, %86 : vector<4x64xf32>
    %88 = math.tanh %87 : vector<4x64xf32>
    %c76 = arith.constant 76 : index
    %c0_52 = arith.constant 0 : index
    %89 = vector.load %arg7[%c76, %c0_52] : memref<120x64xf32, #tpu.memory_space<vmem>>, vector<4x64xf32>
    tpu.vector_store %arg7[%c76, %c0_52], %88 {strides = array<i32>} : memref<120x64xf32, #tpu.memory_space<vmem>>, vector<4x64xf32>,
    %cst_53 = arith.constant dense<0.000000e+00> : vector<4x64xf32>
    %90 = tpu.matmul %88, %2, %cst_53 {dimension_numbers = #tpu.dot_dimension_numbers<[1], [0], [0], [1], [0, 0, 1, 1], [], []>} : vector<4x64xf32>, vector<64x64xf32>, vector<4x64xf32> -> vector<4x64xf32>
    %91 = arith.addf %8, %90 : vector<4x64xf32>
    %92 = math.tanh %91 : vector<4x64xf32>
    %c80 = arith.constant 80 : index
    %c0_54 = arith.constant 0 : index
    %93 = vector.load %arg7[%c80, %c0_54] : memref<120x64xf32, #tpu.memory_space<vmem>>, vector<4x64xf32>
    tpu.vector_store %arg7[%c80, %c0_54], %92 {strides = array<i32>} : memref<120x64xf32, #tpu.memory_space<vmem>>, vector<4x64xf32>,
    %cst_55 = arith.constant dense<0.000000e+00> : vector<4x64xf32>
    %94 = tpu.matmul %92, %2, %cst_55 {dimension_numbers = #tpu.dot_dimension_numbers<[1], [0], [0], [1], [0, 0, 1, 1], [], []>} : vector<4x64xf32>, vector<64x64xf32>, vector<4x64xf32> -> vector<4x64xf32>
    %95 = arith.addf %8, %94 : vector<4x64xf32>
    %96 = math.tanh %95 : vector<4x64xf32>
    %c84 = arith.constant 84 : index
    %c0_56 = arith.constant 0 : index
    %97 = vector.load %arg7[%c84, %c0_56] : memref<120x64xf32, #tpu.memory_space<vmem>>, vector<4x64xf32>
    tpu.vector_store %arg7[%c84, %c0_56], %96 {strides = array<i32>} : memref<120x64xf32, #tpu.memory_space<vmem>>, vector<4x64xf32>,
    %cst_57 = arith.constant dense<0.000000e+00> : vector<4x64xf32>
    %98 = tpu.matmul %96, %2, %cst_57 {dimension_numbers = #tpu.dot_dimension_numbers<[1], [0], [0], [1], [0, 0, 1, 1], [], []>} : vector<4x64xf32>, vector<64x64xf32>, vector<4x64xf32> -> vector<4x64xf32>
    %99 = arith.addf %8, %98 : vector<4x64xf32>
    %100 = math.tanh %99 : vector<4x64xf32>
    %c88 = arith.constant 88 : index
    %c0_58 = arith.constant 0 : index
    %101 = vector.load %arg7[%c88, %c0_58] : memref<120x64xf32, #tpu.memory_space<vmem>>, vector<4x64xf32>
    tpu.vector_store %arg7[%c88, %c0_58], %100 {strides = array<i32>} : memref<120x64xf32, #tpu.memory_space<vmem>>, vector<4x64xf32>,
    %cst_59 = arith.constant dense<0.000000e+00> : vector<4x64xf32>
    %102 = tpu.matmul %100, %2, %cst_59 {dimension_numbers = #tpu.dot_dimension_numbers<[1], [0], [0], [1], [0, 0, 1, 1], [], []>} : vector<4x64xf32>, vector<64x64xf32>, vector<4x64xf32> -> vector<4x64xf32>
    %103 = arith.addf %8, %102 : vector<4x64xf32>
    %104 = math.tanh %103 : vector<4x64xf32>
    %c92 = arith.constant 92 : index
    %c0_60 = arith.constant 0 : index
    %105 = vector.load %arg7[%c92, %c0_60] : memref<120x64xf32, #tpu.memory_space<vmem>>, vector<4x64xf32>
    tpu.vector_store %arg7[%c92, %c0_60], %104 {strides = array<i32>} : memref<120x64xf32, #tpu.memory_space<vmem>>, vector<4x64xf32>,
    %cst_61 = arith.constant dense<0.000000e+00> : vector<4x64xf32>
    %106 = tpu.matmul %104, %2, %cst_61 {dimension_numbers = #tpu.dot_dimension_numbers<[1], [0], [0], [1], [0, 0, 1, 1], [], []>} : vector<4x64xf32>, vector<64x64xf32>, vector<4x64xf32> -> vector<4x64xf32>
    %107 = arith.addf %8, %106 : vector<4x64xf32>
    %108 = math.tanh %107 : vector<4x64xf32>
    %c96 = arith.constant 96 : index
    %c0_62 = arith.constant 0 : index
    %109 = vector.load %arg7[%c96, %c0_62] : memref<120x64xf32, #tpu.memory_space<vmem>>, vector<4x64xf32>
    tpu.vector_store %arg7[%c96, %c0_62], %108 {strides = array<i32>} : memref<120x64xf32, #tpu.memory_space<vmem>>, vector<4x64xf32>,
    %cst_63 = arith.constant dense<0.000000e+00> : vector<4x64xf32>
    %110 = tpu.matmul %108, %2, %cst_63 {dimension_numbers = #tpu.dot_dimension_numbers<[1], [0], [0], [1], [0, 0, 1, 1], [], []>} : vector<4x64xf32>, vector<64x64xf32>, vector<4x64xf32> -> vector<4x64xf32>
    %111 = arith.addf %8, %110 : vector<4x64xf32>
    %112 = math.tanh %111 : vector<4x64xf32>
    %c100 = arith.constant 100 : index
    %c0_64 = arith.constant 0 : index
    %113 = vector.load %arg7[%c100, %c0_64] : memref<120x64xf32, #tpu.memory_space<vmem>>, vector<4x64xf32>
    tpu.vector_store %arg7[%c100, %c0_64], %112 {strides = array<i32>} : memref<120x64xf32, #tpu.memory_space<vmem>>, vector<4x64xf32>,
    %cst_65 = arith.constant dense<0.000000e+00> : vector<4x64xf32>
    %114 = tpu.matmul %112, %2, %cst_65 {dimension_numbers = #tpu.dot_dimension_numbers<[1], [0], [0], [1], [0, 0, 1, 1], [], []>} : vector<4x64xf32>, vector<64x64xf32>, vector<4x64xf32> -> vector<4x64xf32>
    %115 = arith.addf %8, %114 : vector<4x64xf32>
    %116 = math.tanh %115 : vector<4x64xf32>
    %c104 = arith.constant 104 : index
    %c0_66 = arith.constant 0 : index
    %117 = vector.load %arg7[%c104, %c0_66] : memref<120x64xf32, #tpu.memory_space<vmem>>, vector<4x64xf32>
    tpu.vector_store %arg7[%c104, %c0_66], %116 {strides = array<i32>} : memref<120x64xf32, #tpu.memory_space<vmem>>, vector<4x64xf32>,
    %cst_67 = arith.constant dense<0.000000e+00> : vector<4x64xf32>
    %118 = tpu.matmul %116, %2, %cst_67 {dimension_numbers = #tpu.dot_dimension_numbers<[1], [0], [0], [1], [0, 0, 1, 1], [], []>} : vector<4x64xf32>, vector<64x64xf32>, vector<4x64xf32> -> vector<4x64xf32>
    %119 = arith.addf %8, %118 : vector<4x64xf32>
    %120 = math.tanh %119 : vector<4x64xf32>
    %c108 = arith.constant 108 : index
    %c0_68 = arith.constant 0 : index
    %121 = vector.load %arg7[%c108, %c0_68] : memref<120x64xf32, #tpu.memory_space<vmem>>, vector<4x64xf32>
    tpu.vector_store %arg7[%c108, %c0_68], %120 {strides = array<i32>} : memref<120x64xf32, #tpu.memory_space<vmem>>, vector<4x64xf32>,
    %cst_69 = arith.constant dense<0.000000e+00> : vector<4x64xf32>
    %122 = tpu.matmul %120, %2, %cst_69 {dimension_numbers = #tpu.dot_dimension_numbers<[1], [0], [0], [1], [0, 0, 1, 1], [], []>} : vector<4x64xf32>, vector<64x64xf32>, vector<4x64xf32> -> vector<4x64xf32>
    %123 = arith.addf %8, %122 : vector<4x64xf32>
    %124 = math.tanh %123 : vector<4x64xf32>
    %c112 = arith.constant 112 : index
    %c0_70 = arith.constant 0 : index
    %125 = vector.load %arg7[%c112, %c0_70] : memref<120x64xf32, #tpu.memory_space<vmem>>, vector<4x64xf32>
    tpu.vector_store %arg7[%c112, %c0_70], %124 {strides = array<i32>} : memref<120x64xf32, #tpu.memory_space<vmem>>, vector<4x64xf32>,
    %cst_71 = arith.constant dense<0.000000e+00> : vector<4x64xf32>
    %126 = tpu.matmul %124, %2, %cst_71 {dimension_numbers = #tpu.dot_dimension_numbers<[1], [0], [0], [1], [0, 0, 1, 1], [], []>} : vector<4x64xf32>, vector<64x64xf32>, vector<4x64xf32> -> vector<4x64xf32>
    %127 = arith.addf %8, %126 : vector<4x64xf32>
    %128 = math.tanh %127 : vector<4x64xf32>
    %c116 = arith.constant 116 : index
    %c0_72 = arith.constant 0 : index
    %129 = vector.load %arg7[%c116, %c0_72] : memref<120x64xf32, #tpu.memory_space<vmem>>, vector<4x64xf32>
    tpu.vector_store %arg7[%c116, %c0_72], %128 {strides = array<i32>} : memref<120x64xf32, #tpu.memory_space<vmem>>, vector<4x64xf32>,
    %c0_73 = arith.constant 0 : index
    %c0_74 = arith.constant 0 : index
    %130 = vector.load %arg7[%c0_73, %c0_74] : memref<120x64xf32, #tpu.memory_space<vmem>>, vector<120x64xf32>
    %cst_75 = arith.constant dense<0.000000e+00> : vector<120x8xf32>
    %131 = tpu.matmul %130, %4, %cst_75 {dimension_numbers = #tpu.dot_dimension_numbers<[1], [0], [0], [1], [0, 0, 1, 1], [], []>} : vector<120x64xf32>, vector<64x8xf32>, vector<120x8xf32> -> vector<120x8xf32>
    %132 = vector.broadcast %5 : vector<1x8xf32> to vector<120x8xf32>
    %133 = arith.addf %131, %132 : vector<120x8xf32>
    %c0_76 = arith.constant 0 : index
    %c0_77 = arith.constant 0 : index
    %134 = vector.load %arg6[%c0_76, %c0_77] : memref<120x8xf32, #tpu.memory_space<vmem>>, vector<120x8xf32>
    tpu.vector_store %arg6[%c0_76, %c0_77], %133 {strides = array<i32>} : memref<120x8xf32, #tpu.memory_space<vmem>>, vector<120x8xf32>,
    return
  }
}

</mosaic_0001>

<llo_original>
// kernel: tpu_custom_call.1
$region0: #{tpu_custom_call.1}
  #allocation0 [shape = 'u32[]', space=smem, size = 0x4, offset = 0x4, fixed_abs, tag = 'smem constant byte address 0x4 - core index']
  #allocation1 [shape = 'u32[144,128]{1,0:T(1,128)}', space=vmem, size = 0x12000, scoped, tag = 'internal scratch']
  #allocation2 [shape = 'f32[120,64]{1,0:T(8,128)}', space=vmem, size = 0xf000, scoped, tag = 'scratch operand']
  %s0 = inlined_call_operand.vmem [shape: f32[4,16], index: 0, kind: input, shape index: {}]
  %s1 = inlined_call_operand.hbm [shape: f32[16,64], index: 1, kind: input, shape index: {}]
  %s2 = inlined_call_operand.vmem [shape: f32[64,64], index: 2, kind: input, shape index: {}]
  %s3 = inlined_call_operand.vmem [shape: f32[1,64], index: 3, kind: input, shape index: {}]
  %s4 = inlined_call_operand.vmem [shape: f32[64,8], index: 4, kind: input, shape index: {}]
  %s5 = inlined_call_operand.vmem [shape: f32[1,8], index: 5, kind: input, shape index: {}]
  %s6 = inlined_call_operand.vmem [shape: f32[120,8], index: 6, kind: output, shape index: {}]
  %s7 = sld [smem:[#allocation0]]
  $region38: #{tpu_custom_call.1} parent=0
    _
  %s9 = ssub.s32 1, %s7
  %s10 = scalar_select 0, %s9, %s7
  $region1: #{tpu_custom_call.1} parent=0
    #allocation3 [shape = 'u8[8192]{0}', space=vmem, size = 0x2000, scoped, tag = 'input window, operand 1, single buffered']
    #allocation4 [shape = 's32[1]{0}', space=sflag, size = 0x4, scoped, tag = 'scoped memory for tpu_custom_call.1']
    %11 = vsyncpa [#allocation4], 0
    // Predicated region
    $region2: #{tpu_custom_call.1} parent=1 // pred_check
      _
    $region3: #{tpu_custom_call.1} parent=1 // pred_check_branch
      %13 = sbr.rel (0) target = $region5
    $region4: #{tpu_custom_call.1} parent=1 // pred_region
      _
    $region5: #{tpu_custom_call.1} parent=1 // pred_fallthru
      _
    // Predicated region
    $region6: #{tpu_custom_call.1} parent=1 // pred_check
      _
    $region7: #{tpu_custom_call.1} parent=1 // pred_check_branch
      %15 = sbr.rel (0) target = $region9
    $region8: #{tpu_custom_call.1} parent=1 // pred_region
      %s17 = ssub.s32 256, 256
      %18 = vsyncadd [#allocation4], %s17
      %s19 = sshll.u32 [#allocation3], 4
      %s20 = int_to_ptr.vmem [resolvable:$true] %s19
      %25 = dma.hbm_to_vmem [thread:$0]  %s1, 256, %s20, [#allocation4], 128, 128, 8
    $region9: #{tpu_custom_call.1} parent=1 // pred_fallthru
      _
    // Predicated region
    $region10: #{tpu_custom_call.1} parent=1 // pred_check
      _
    $region11: #{tpu_custom_call.1} parent=1 // pred_check_branch
      %27 = sbr.rel (0) target = $region13
    $region12: #{tpu_custom_call.1} parent=1 // pred_region
      _
    $region13: #{tpu_custom_call.1} parent=1 // pred_fallthru
      _
    // Predicated region
    $region14: #{tpu_custom_call.1} parent=1 // pred_check
      _
    $region15: #{tpu_custom_call.1} parent=1 // pred_check_branch
      %29 = sbr.rel (0) target = $region17
    $region16: #{tpu_custom_call.1} parent=1 // pred_region
      _
    $region17: #{tpu_custom_call.1} parent=1 // pred_fallthru
      _
    // Predicated region
    $region18: #{tpu_custom_call.1} parent=1 // pred_check
      _
    $region19: #{tpu_custom_call.1} parent=1 // pred_check_branch
      %31 = sbr.rel (0) target = $region21
    $region20: #{tpu_custom_call.1} parent=1 // pred_region
      _
    $region21: #{tpu_custom_call.1} parent=1 // pred_fallthru
      _
    // Predicated region
    $region22: #{tpu_custom_call.1} parent=1 // pred_check
      _
    $region23: #{tpu_custom_call.1} parent=1 // pred_check_branch
      %33 = sbr.rel (0) target = $region25
    $region24: #{tpu_custom_call.1} parent=1 // pred_region
      _
    $region25: #{tpu_custom_call.1} parent=1 // pred_fallthru
      _
    // Predicated region
    $region26: #{tpu_custom_call.1} parent=1 // pred_check
      _
    $region27: #{tpu_custom_call.1} parent=1 // pred_check_branch
      %35 = sbr.rel (0) target = $region29
    $region28: #{tpu_custom_call.1} parent=1 // pred_region
      %36 = dma.done [#allocation4], 256
    $region29: #{tpu_custom_call.1} parent=1 // pred_fallthru
      _
    %v37 = vld [vmem:[%s0] sm:$0xf]
    %v38 = vld [vmem:[#allocation3] sm:$0xff]
    %v39 = vld [vmem:[#allocation3 + $0x8] sm:$0xff]
    %v40 = vld [vmem:[%s2] sm:$0xff]
    %v41 = vld [vmem:[%s2 + $0x8] sm:$0xff]
    %v42 = vld [vmem:[%s2 + $0x10] sm:$0xff]
    %v43 = vld [vmem:[%s2 + $0x18] sm:$0xff]
    %v44 = vld [vmem:[%s2 + $0x20] sm:$0xff]
    %v45 = vld [vmem:[%s2 + $0x28] sm:$0xff]
    %v46 = vld [vmem:[%s2 + $0x30] sm:$0xff]
    %v47 = vld [vmem:[%s2 + $0x38] sm:$0xff]
    %v48 = vld [vmem:[%s3] sm:$0x1]
    %v49 = vld [vmem:[%s4] sm:$0xff]
    %v50 = vld [vmem:[%s4 + $0x8] sm:$0xff]
    %v51 = vld [vmem:[%s4 + $0x10] sm:$0xff]
    %v52 = vld [vmem:[%s4 + $0x18] sm:$0xff]
    %v53 = vld [vmem:[%s4 + $0x20] sm:$0xff]
    %v54 = vld [vmem:[%s4 + $0x28] sm:$0xff]
    %v55 = vld [vmem:[%s4 + $0x30] sm:$0xff]
    %v56 = vld [vmem:[%s4 + $0x38] sm:$0xff]
    %v57 = vld [vmem:[%s5] sm:$0x1]
    %v59 = vlaneseq
    %v60 = vshrl.u32 %v59, 7
    %v61 = vsub.s32 0, %v60
    %v62 = vrot.slane %v48, %v61
    %vm64 = vcmask 130048
    %v66 = vsel %vm64, %v37, 0
    %68 = vmatprep.subr.mxu0 0.0
    %69 = vmatpush1.msra.mxu0 0.0
    %70 = vmatprep.subr.mxu0 0.0
    %71 = vmatpush1.msra.mxu0 0.0
    %72 = vmatprep.subr.mxu0 0.0
    %73 = vmatpush1.msra.mxu0 0.0
    %74 = vmatprep.subr.mxu0 0.0
    %75 = vmatpush1.msra.mxu0 0.0
    %76 = vmatprep.subr.mxu0 0.0
    %77 = vmatpush1.msra.mxu0 0.0
    %78 = vmatprep.subr.mxu0 0.0
    %79 = vmatpush1.msra.mxu0 0.0
    %80 = vmatprep.subr.mxu0 0.0
    %81 = vmatpush1.msra.mxu0 0.0
    %82 = vmatprep.subr.mxu0 0.0
    %83 = vmatpush1.msra.mxu0 0.0
    %84 = vmatprep.subr.mxu0 0.0
    %85 = vmatpush1.msra.mxu0 0.0
    %86 = vmatprep.subr.mxu0 0.0
    %87 = vmatpush1.msra.mxu0 0.0
    %88 = vmatprep.subr.mxu0 0.0
    %89 = vmatpush1.msra.mxu0 0.0
    %90 = vmatprep.subr.mxu0 0.0
    %91 = vmatpush1.msra.mxu0 0.0
    %92 = vmatprep.subr.mxu0 0.0
    %93 = vmatpush1.msra.mxu0 0.0
    %94 = vmatprep.subr.mxu0 0.0
    %95 = vmatpush1.msra.mxu0 0.0
    %96 = vmatprep.subr.mxu0 0.0
    %97 = vmatpush1.msra.mxu0 %v39
    %98 = vmatprep.subr.mxu0 0.0
    %99 = vmatpush1.msra.mxu0 %v38
    %100 = vmatprep.subr.mxu0 0.0
    %101 = vmatpush2.msra.mxu0 0.0
    %102 = vmatprep.subr.mxu0 0.0
    %103 = vmatpush2.msra.mxu0 0.0
    %104 = vmatprep.subr.mxu0 0.0
    %105 = vmatpush2.msra.mxu0 0.0
    %106 = vmatprep.subr.mxu0 0.0
    %107 = vmatpush2.msra.mxu0 0.0
    %108 = vmatprep.subr.mxu0 0.0
    %109 = vmatpush2.msra.mxu0 0.0
    %110 = vmatprep.subr.mxu0 0.0
    %111 = vmatpush2.msra.mxu0 0.0
    %112 = vmatprep.subr.mxu0 0.0
    %113 = vmatpush2.msra.mxu0 0.0
    %114 = vmatprep.subr.mxu0 0.0
    %115 = vmatpush2.msra.mxu0 0.0
    %116 = vmatprep.subr.mxu0 0.0
    %117 = vmatpush2.msra.mxu0 0.0
    %118 = vmatprep.subr.mxu0 0.0
    %119 = vmatpush2.msra.mxu0 0.0
    %120 = vmatprep.subr.mxu0 0.0
    %121 = vmatpush2.msra.mxu0 0.0
    %122 = vmatprep.subr.mxu0 0.0
    %123 = vmatpush2.msra.mxu0 0.0
    %124 = vmatprep.subr.mxu0 0.0
    %125 = vmatpush2.msra.mxu0 0.0
    %126 = vmatprep.subr.mxu0 0.0
    %127 = vmatpush2.msra.mxu0 0.0
    %128 = vmatprep.subr.mxu0 0.0
    %129 = vmatpush2.msra.mxu0 0.0
    %130 = vmatprep.subr.mxu0 0.0
    %131 = vmatpush2.msra.mxu0 0.0
    %132 = vmatprep.mubr.f32.mxu0 0.0
    %133 = vmatmul.mubr.f32.gmra.mxu0 %v66
    %v134 = vpop.f32.mrf.mxu0
    %v135 = vadd.f32 %v62, %v134
    %v136 = vpop.f32.mrf.mxu0
    %137 = vdwg.mxu0
    %vm138 = vcmask 523264
    %v140 = vsel %vm138, 0.0, 0
    %142 = vmatprep.subr.mxu0 0.0
    %143 = vmatpush1.msra.mxu0 0.0
    %144 = vmatprep.subr.mxu0 0.0
    %145 = vmatpush1.msra.mxu0 0.0
    %146 = vmatprep.subr.mxu0 0.0
    %147 = vmatpush1.msra.mxu0 0.0
    %148 = vmatprep.subr.mxu0 0.0
    %149 = vmatpush1.msra.mxu0 0.0
    %150 = vmatprep.subr.mxu0 0.0
    %151 = vmatpush1.msra.mxu0 0.0
    %152 = vmatprep.subr.mxu0 0.0
    %153 = vmatpush1.msra.mxu0 0.0
    %154 = vmatprep.subr.mxu0 0.0
    %155 = vmatpush1.msra.mxu0 0.0
    %156 = vmatprep.subr.mxu0 0.0
    %157 = vmatpush1.msra.mxu0 0.0
    %158 = vmatprep.subr.mxu0 0.0
    %159 = vmatpush1.msra.mxu0 %v47
    %160 = vmatprep.subr.mxu0 0.0
    %161 = vmatpush1.msra.mxu0 %v46
    %162 = vmatprep.subr.mxu0 0.0
    %163 = vmatpush1.msra.mxu0 %v45
    %164 = vmatprep.subr.mxu0 0.0
    %165 = vmatpush1.msra.mxu0 %v44
    %166 = vmatprep.subr.mxu0 0.0
    %167 = vmatpush1.msra.mxu0 %v43
    %168 = vmatprep.subr.mxu0 0.0
    %169 = vmatpush1.msra.mxu0 %v42
    %170 = vmatprep.subr.mxu0 0.0
    %171 = vmatpush1.msra.mxu0 %v41
    %172 = vmatprep.subr.mxu0 0.0
    %173 = vmatpush1.msra.mxu0 %v40
    %174 = vmatprep.subr.mxu0 0.0
    %175 = vmatpush2.msra.mxu0 0.0
    %176 = vmatprep.subr.mxu0 0.0
    %177 = vmatpush2.msra.mxu0 0.0
    %178 = vmatprep.subr.mxu0 0.0
    %179 = vmatpush2.msra.mxu0 0.0
    %180 = vmatprep.subr.mxu0 0.0
    %181 = vmatpush2.msra.mxu0 0.0
    %182 = vmatprep.subr.mxu0 0.0
    %183 = vmatpush2.msra.mxu0 0.0
    %184 = vmatprep.subr.mxu0 0.0
    %185 = vmatpush2.msra.mxu0 0.0
    %186 = vmatprep.subr.mxu0 0.0
    %187 = vmatpush2.msra.mxu0 0.0
    %188 = vmatprep.subr.mxu0 0.0
    %189 = vmatpush2.msra.mxu0 0.0
    %190 = vmatprep.subr.mxu0 0.0
    %191 = vmatpush2.msra.mxu0 0.0
    %192 = vmatprep.subr.mxu0 0.0
    %193 = vmatpush2.msra.mxu0 0.0
    %194 = vmatprep.subr.mxu0 0.0
    %195 = vmatpush2.msra.mxu0 0.0
    %196 = vmatprep.subr.mxu0 0.0
    %197 = vmatpush2.msra.mxu0 0.0
    %198 = vmatprep.subr.mxu0 0.0
    %199 = vmatpush2.msra.mxu0 0.0
    %200 = vmatprep.subr.mxu0 0.0
    %201 = vmatpush2.msra.mxu0 0.0
    %202 = vmatprep.subr.mxu0 0.0
    %203 = vmatpush2.msra.mxu0 0.0
    %204 = vmatprep.subr.mxu0 0.0
    %205 = vmatpush2.msra.mxu0 0.0
    %206 = vmatprep.mubr.f32.mxu0 0.0
    %207 = vmatmul.mubr.f32.gmra.mxu0 %v140
    %v208 = vpop.f32.mrf.mxu0
    %v209 = vadd.f32 0.0, %v208
    %v210 = vpop.f32.mrf.mxu0
    %211 = vdwg.mxu0
    %v212 = vadd.f32 %v135, %v209
    %v213 = vtanh.pop %v212
    %vm214 = vcmask 519168
    %215 = vst.msk [vmem:[#allocation2] sm:$0xf] %vm214, %v213
    %v217 = vsel %vm138, %v213, 0
    %219 = vmatprep.subr.mxu0 0.0
    %220 = vmatpush1.msra.mxu0 0.0
    %221 = vmatprep.subr.mxu0 0.0
    %222 = vmatpush1.msra.mxu0 0.0
    %223 = vmatprep.subr.mxu0 0.0
    %224 = vmatpush1.msra.mxu0 0.0
    %225 = vmatprep.subr.mxu0 0.0
    %226 = vmatpush1.msra.mxu0 0.0
    %227 = vmatprep.subr.mxu0 0.0
    %228 = vmatpush1.msra.mxu0 0.0
    %229 = vmatprep.subr.mxu0 0.0
    %230 = vmatpush1.msra.mxu0 0.0
    %231 = vmatprep.subr.mxu0 0.0
    %232 = vmatpush1.msra.mxu0 0.0
    %233 = vmatprep.subr.mxu0 0.0
    %234 = vmatpush1.msra.mxu0 0.0
    %235 = vmatprep.subr.mxu0 0.0
    %236 = vmatpush1.msra.mxu0 %v47
    %237 = vmatprep.subr.mxu0 0.0
    %238 = vmatpush1.msra.mxu0 %v46
    %239 = vmatprep.subr.mxu0 0.0
    %240 = vmatpush1.msra.mxu0 %v45
    %241 = vmatprep.subr.mxu0 0.0
    %242 = vmatpush1.msra.mxu0 %v44
    %243 = vmatprep.subr.mxu0 0.0
    %244 = vmatpush1.msra.mxu0 %v43
    %245 = vmatprep.subr.mxu0 0.0
    %246 = vmatpush1.msra.mxu0 %v42
    %247 = vmatprep.subr.mxu0 0.0
    %248 = vmatpush1.msra.mxu0 %v41
    %249 = vmatprep.subr.mxu0 0.0
    %250 = vmatpush1.msra.mxu0 %v40
    %251 = vmatprep.subr.mxu0 0.0
    %252 = vmatpush2.msra.mxu0 0.0
    %253 = vmatprep.subr.mxu0 0.0
    %254 = vmatpush2.msra.mxu0 0.0
    %255 = vmatprep.subr.mxu0 0.0
    %256 = vmatpush2.msra.mxu0 0.0
    %257 = vmatprep.subr.mxu0 0.0
    %258 = vmatpush2.msra.mxu0 0.0
    %259 = vmatprep.subr.mxu0 0.0
    %260 = vmatpush2.msra.mxu0 0.0
    %261 = vmatprep.subr.mxu0 0.0
    %262 = vmatpush2.msra.mxu0 0.0
    %263 = vmatprep.subr.mxu0 0.0
    %264 = vmatpush2.msra.mxu0 0.0
    %265 = vmatprep.subr.mxu0 0.0
    %266 = vmatpush2.msra.mxu0 0.0
    %267 = vmatprep.subr.mxu0 0.0
    %268 = vmatpush2.msra.mxu0 0.0
    %269 = vmatprep.subr.mxu0 0.0
    %270 = vmatpush2.msra.mxu0 0.0
    %271 = vmatprep.subr.mxu0 0.0
    %272 = vmatpush2.msra.mxu0 0.0
    %273 = vmatprep.subr.mxu0 0.0
    %274 = vmatpush2.msra.mxu0 0.0
    %275 = vmatprep.subr.mxu0 0.0
    %276 = vmatpush2.msra.mxu0 0.0
    %277 = vmatprep.subr.mxu0 0.0
    %278 = vmatpush2.msra.mxu0 0.0
    %279 = vmatprep.subr.mxu0 0.0
    %280 = vmatpush2.msra.mxu0 0.0
    %281 = vmatprep.subr.mxu0 0.0
    %282 = vmatpush2.msra.mxu0 0.0
    %283 = vmatprep.mubr.f32.mxu0 0.0
    %284 = vmatmul.mubr.f32.gmra.mxu0 %v217
    %v285 = vpop.f32.mrf.mxu0
    %v286 = vadd.f32 0.0, %v285
    %v287 = vpop.f32.mrf.mxu0
    %288 = vdwg.mxu0
    %v289 = vadd.f32 %v135, %v286
    %v290 = vtanh.pop %v289
    %291 = vst.msk [vmem:[#allocation2 + $0x4] sm:$0xf] %vm214, %v290
    %v293 = vsel %vm138, %v290, 0
    %295 = vmatprep.subr.mxu0 0.0
    %296 = vmatpush1.msra.mxu0 0.0
    %297 = vmatprep.subr.mxu0 0.0
    %298 = vmatpush1.msra.mxu0 0.0
    %299 = vmatprep.subr.mxu0 0.0
    %300 = vmatpush1.msra.mxu0 0.0
    %301 = vmatprep.subr.mxu0 0.0
    %302 = vmatpush1.msra.mxu0 0.0
    %303 = vmatprep.subr.mxu0 0.0
    %304 = vmatpush1.msra.mxu0 0.0
    %305 = vmatprep.subr.mxu0 0.0
    %306 = vmatpush1.msra.mxu0 0.0
    %307 = vmatprep.subr.mxu0 0.0
    %308 = vmatpush1.msra.mxu0 0.0
    %309 = vmatprep.subr.mxu0 0.0
    %310 = vmatpush1.msra.mxu0 0.0
    %311 = vmatprep.subr.mxu0 0.0
    %312 = vmatpush1.msra.mxu0 %v47
    %313 = vmatprep.subr.mxu0 0.0
    %314 = vmatpush1.msra.mxu0 %v46
    %315 = vmatprep.subr.mxu0 0.0
    %316 = vmatpush1.msra.mxu0 %v45
    %317 = vmatprep.subr.mxu0 0.0
    %318 = vmatpush1.msra.mxu0 %v44
    %319 = vmatprep.subr.mxu0 0.0
    %320 = vmatpush1.msra.mxu0 %v43
    %321 = vmatprep.subr.mxu0 0.0
    %322 = vmatpush1.msra.mxu0 %v42
    %323 = vmatprep.subr.mxu0 0.0
    %324 = vmatpush1.msra.mxu0 %v41
    %325 = vmatprep.subr.mxu0 0.0
    %326 = vmatpush1.msra.mxu0 %v40
    %327 = vmatprep.subr.mxu0 0.0
    %328 = vmatpush2.msra.mxu0 0.0
    %329 = vmatprep.subr.mxu0 0.0
    %330 = vmatpush2.msra.mxu0 0.0
    %331 = vmatprep.subr.mxu0 0.0
    %332 = vmatpush2.msra.mxu0 0.0
    %333 = vmatprep.subr.mxu0 0.0
    %334 = vmatpush2.msra.mxu0 0.0
    %335 = vmatprep.subr.mxu0 0.0
    %336 = vmatpush2.msra.mxu0 0.0
    %337 = vmatprep.subr.mxu0 0.0
    %338 = vmatpush2.msra.mxu0 0.0
    %339 = vmatprep.subr.mxu0 0.0
    %340 = vmatpush2.msra.mxu0 0.0
    %341 = vmatprep.subr.mxu0 0.0
    %342 = vmatpush2.msra.mxu0 0.0
    %343 = vmatprep.subr.mxu0 0.0
    %344 = vmatpush2.msra.mxu0 0.0
    %345 = vmatprep.subr.mxu0 0.0
    %346 = vmatpush2.msra.mxu0 0.0
    %347 = vmatprep.subr.mxu0 0.0
    %348 = vmatpush2.msra.mxu0 0.0
    %349 = vmatprep.subr.mxu0 0.0
    %350 = vmatpush2.msra.mxu0 0.0
    %351 = vmatprep.subr.mxu0 0.0
    %352 = vmatpush2.msra.mxu0 0.0
    %353 = vmatprep.subr.mxu0 0.0
    %354 = vmatpush2.msra.mxu0 0.0
    %355 = vmatprep.subr.mxu0 0.0
    %356 = vmatpush2.msra.mxu0 0.0
    %357 = vmatprep.subr.mxu0 0.0
    %358 = vmatpush2.msra.mxu0 0.0
    %359 = vmatprep.mubr.f32.mxu0 0.0
    %360 = vmatmul.mubr.f32.gmra.mxu0 %v293
    %v361 = vpop.f32.mrf.mxu0
    %v362 = vadd.f32 0.0, %v361
    %v363 = vpop.f32.mrf.mxu0
    %364 = vdwg.mxu0
    %v365 = vadd.f32 %v135, %v362
    %v366 = vtanh.pop %v365
    %367 = vst.msk [vmem:[#allocation2 + $0x8] sm:$0xf] %vm214, %v366
    %v369 = vsel %vm138, %v366, 0
    %371 = vmatprep.subr.mxu0 0.0
    %372 = vmatpush1.msra.mxu0 0.0
    %373 = vmatprep.subr.mxu0 0.0
    %374 = vmatpush1.msra.mxu0 0.0
    %375 = vmatprep.subr.mxu0 0.0
    %376 = vmatpush1.msra.mxu0 0.0
    %377 = vmatprep.subr.mxu0 0.0
    %378 = vmatpush1.msra.mxu0 0.0
    %379 = vmatprep.subr.mxu0 0.0
    %380 = vmatpush1.msra.mxu0 0.0
    %381 = vmatprep.subr.mxu0 0.0
    %382 = vmatpush1.msra.mxu0 0.0
    %383 = vmatprep.subr.mxu0 0.0
    %384 = vmatpush1.msra.mxu0 0.0
    %385 = vmatprep.subr.mxu0 0.0
    %386 = vmatpush1.msra.mxu0 0.0
    %387 = vmatprep.subr.mxu0 0.0
    %388 = vmatpush1.msra.mxu0 %v47
    %389 = vmatprep.subr.mxu0 0.0
    %390 = vmatpush1.msra.mxu0 %v46
    %391 = vmatprep.subr.mxu0 0.0
    %392 = vmatpush1.msra.mxu0 %v45
    %393 = vmatprep.subr.mxu0 0.0
    %394 = vmatpush1.msra.mxu0 %v44
    %395 = vmatprep.subr.mxu0 0.0
    %396 = vmatpush1.msra.mxu0 %v43
    %397 = vmatprep.subr.mxu0 0.0
    %398 = vmatpush1.msra.mxu0 %v42
    %399 = vmatprep.subr.mxu0 0.0
    %400 = vmatpush1.msra.mxu0 %v41
    %401 = vmatprep.subr.mxu0 0.0
    %402 = vmatpush1.msra.mxu0 %v40
    %403 = vmatprep.subr.mxu0 0.0
    %404 = vmatpush2.msra.mxu0 0.0
    %405 = vmatprep.subr.mxu0 0.0
    %406 = vmatpush2.msra.mxu0 0.0
    %407 = vmatprep.subr.mxu0 0.0
    %408 = vmatpush2.msra.mxu0 0.0
    %409 = vmatprep.subr.mxu0 0.0
    %410 = vmatpush2.msra.mxu0 0.0
    %411 = vmatprep.subr.mxu0 0.0
    %412 = vmatpush2.msra.mxu0 0.0
    %413 = vmatprep.subr.mxu0 0.0
    %414 = vmatpush2.msra.mxu0 0.0
    %415 = vmatprep.subr.mxu0 0.0
    %416 = vmatpush2.msra.mxu0 0.0
    %417 = vmatprep.subr.mxu0 0.0
    %418 = vmatpush2.msra.mxu0 0.0
    %419 = vmatprep.subr.mxu0 0.0
    %420 = vmatpush2.msra.mxu0 0.0
    %421 = vmatprep.subr.mxu0 0.0
    %422 = vmatpush2.msra.mxu0 0.0
    %423 = vmatprep.subr.mxu0 0.0
    %424 = vmatpush2.msra.mxu0 0.0
    %425 = vmatprep.subr.mxu0 0.0
    %426 = vmatpush2.msra.mxu0 0.0
    %427 = vmatprep.subr.mxu0 0.0
    %428 = vmatpush2.msra.mxu0 0.0
    %429 = vmatprep.subr.mxu0 0.0
    %430 = vmatpush2.msra.mxu0 0.0
    %431 = vmatprep.subr.mxu0 0.0
    %432 = vmatpush2.msra.mxu0 0.0
    %433 = vmatprep.subr.mxu0 0.0
    %434 = vmatpush2.msra.mxu0 0.0
    %435 = vmatprep.mubr.f32.mxu0 0.0
    %436 = vmatmul.mubr.f32.gmra.mxu0 %v369
    %v437 = vpop.f32.mrf.mxu0
    %v438 = vadd.f32 0.0, %v437
    %v439 = vpop.f32.mrf.mxu0
    %440 = vdwg.mxu0
    %v441 = vadd.f32 %v135, %v438
    %v442 = vtanh.pop %v441
    %443 = vst.msk [vmem:[#allocation2 + $0xc] sm:$0xf] %vm214, %v442
    %v445 = vsel %vm138, %v442, 0
    %447 = vmatprep.subr.mxu0 0.0
    %448 = vmatpush1.msra.mxu0 0.0
    %449 = vmatprep.subr.mxu0 0.0
    %450 = vmatpush1.msra.mxu0 0.0
    %451 = vmatprep.subr.mxu0 0.0
    %452 = vmatpush1.msra.mxu0 0.0
    %453 = vmatprep.subr.mxu0 0.0
    %454 = vmatpush1.msra.mxu0 0.0
    %455 = vmatprep.subr.mxu0 0.0
    %456 = vmatpush1.msra.mxu0 0.0
    %457 = vmatprep.subr.mxu0 0.0
    %458 = vmatpush1.msra.mxu0 0.0
    %459 = vmatprep.subr.mxu0 0.0
    %460 = vmatpush1.msra.mxu0 0.0
    %461 = vmatprep.subr.mxu0 0.0
    %462 = vmatpush1.msra.mxu0 0.0
    %463 = vmatprep.subr.mxu0 0.0
    %464 = vmatpush1.msra.mxu0 %v47
    %465 = vmatprep.subr.mxu0 0.0
    %466 = vmatpush1.msra.mxu0 %v46
    %467 = vmatprep.subr.mxu0 0.0
    %468 = vmatpush1.msra.mxu0 %v45
    %469 = vmatprep.subr.mxu0 0.0
    %470 = vmatpush1.msra.mxu0 %v44
    %471 = vmatprep.subr.mxu0 0.0
    %472 = vmatpush1.msra.mxu0 %v43
    %473 = vmatprep.subr.mxu0 0.0
    %474 = vmatpush1.msra.mxu0 %v42
    %475 = vmatprep.subr.mxu0 0.0
    %476 = vmatpush1.msra.mxu0 %v41
    %477 = vmatprep.subr.mxu0 0.0
    %478 = vmatpush1.msra.mxu0 %v40
    %479 = vmatprep.subr.mxu0 0.0
    %480 = vmatpush2.msra.mxu0 0.0
    %481 = vmatprep.subr.mxu0 0.0
    %482 = vmatpush2.msra.mxu0 0.0
    %483 = vmatprep.subr.mxu0 0.0
    %484 = vmatpush2.msra.mxu0 0.0
    %485 = vmatprep.subr.mxu0 0.0
    %486 = vmatpush2.msra.mxu0 0.0
    %487 = vmatprep.subr.mxu0 0.0
    %488 = vmatpush2.msra.mxu0 0.0
    %489 = vmatprep.subr.mxu0 0.0
    %490 = vmatpush2.msra.mxu0 0.0
    %491 = vmatprep.subr.mxu0 0.0
    %492 = vmatpush2.msra.mxu0 0.0
    %493 = vmatprep.subr.mxu0 0.0
    %494 = vmatpush2.msra.mxu0 0.0
    %495 = vmatprep.subr.mxu0 0.0
    %496 = vmatpush2.msra.mxu0 0.0
    %497 = vmatprep.subr.mxu0 0.0
    %498 = vmatpush2.msra.mxu0 0.0
    %499 = vmatprep.subr.mxu0 0.0
    %500 = vmatpush2.msra.mxu0 0.0
    %501 = vmatprep.subr.mxu0 0.0
    %502 = vmatpush2.msra.mxu0 0.0
    %503 = vmatprep.subr.mxu0 0.0
    %504 = vmatpush2.msra.mxu0 0.0
    %505 = vmatprep.subr.mxu0 0.0
    %506 = vmatpush2.msra.mxu0 0.0
    %507 = vmatprep.subr.mxu0 0.0
    %508 = vmatpush2.msra.mxu0 0.0
    %509 = vmatprep.subr.mxu0 0.0
    %510 = vmatpush2.msra.mxu0 0.0
    %511 = vmatprep.mubr.f32.mxu0 0.0
    %512 = vmatmul.mubr.f32.gmra.mxu0 %v445
    %v513 = vpop.f32.mrf.mxu0
    %v514 = vadd.f32 0.0, %v513
    %v515 = vpop.f32.mrf.mxu0
    %516 = vdwg.mxu0
    %v517 = vadd.f32 %v135, %v514
    %v518 = vtanh.pop %v517
    %519 = vst.msk [vmem:[#allocation2 + $0x10] sm:$0xf] %vm214, %v518
    %v521 = vsel %vm138, %v518, 0
    %523 = vmatprep.subr.mxu0 0.0
    %524 = vmatpush1.msra.mxu0 0.0
    %525 = vmatprep.subr.mxu0 0.0
    %526 = vmatpush1.msra.mxu0 0.0
    %527 = vmatprep.subr.mxu0 0.0
    %528 = vmatpush1.msra.mxu0 0.0
    %529 = vmatprep.subr.mxu0 0.0
    %530 = vmatpush1.msra.mxu0 0.0
    %531 = vmatprep.subr.mxu0 0.0
    %532 = vmatpush1.msra.mxu0 0.0
    %533 = vmatprep.subr.mxu0 0.0
    %534 = vmatpush1.msra.mxu0 0.0
    %535 = vmatprep.subr.mxu0 0.0
    %536 = vmatpush1.msra.mxu0 0.0
    %537 = vmatprep.subr.mxu0 0.0
    %538 = vmatpush1.msra.mxu0 0.0
    %539 = vmatprep.subr.mxu0 0.0
    %540 = vmatpush1.msra.mxu0 %v47
    %541 = vmatprep.subr.mxu0 0.0
    %542 = vmatpush1.msra.mxu0 %v46
    %543 = vmatprep.subr.mxu0 0.0
    %544 = vmatpush1.msra.mxu0 %v45
    %545 = vmatprep.subr.mxu0 0.0
    %546 = vmatpush1.msra.mxu0 %v44
    %547 = vmatprep.subr.mxu0 0.0
    %548 = vmatpush1.msra.mxu0 %v43
    %549 = vmatprep.subr.mxu0 0.0
    %550 = vmatpush1.msra.mxu0 %v42
    %551 = vmatprep.subr.mxu0 0.0
    %552 = vmatpush1.msra.mxu0 %v41
    %553 = vmatprep.subr.mxu0 0.0
    %554 = vmatpush1.msra.mxu0 %v40
    %555 = vmatprep.subr.mxu0 0.0
    %556 = vmatpush2.msra.mxu0 0.0
    %557 = vmatprep.subr.mxu0 0.0
    %558 = vmatpush2.msra.mxu0 0.0
    %559 = vmatprep.subr.mxu0 0.0
    %560 = vmatpush2.msra.mxu0 0.0
    %561 = vmatprep.subr.mxu0 0.0
    %562 = vmatpush2.msra.mxu0 0.0
    %563 = vmatprep.subr.mxu0 0.0
    %564 = vmatpush2.msra.mxu0 0.0
    %565 = vmatprep.subr.mxu0 0.0
    %566 = vmatpush2.msra.mxu0 0.0
    %567 = vmatprep.subr.mxu0 0.0
    %568 = vmatpush2.msra.mxu0 0.0
    %569 = vmatprep.subr.mxu0 0.0
    %570 = vmatpush2.msra.mxu0 0.0
    %571 = vmatprep.subr.mxu0 0.0
    %572 = vmatpush2.msra.mxu0 0.0
    %573 = vmatprep.subr.mxu0 0.0
    %574 = vmatpush2.msra.mxu0 0.0
    %575 = vmatprep.subr.mxu0 0.0
    %576 = vmatpush2.msra.mxu0 0.0
    %577 = vmatprep.subr.mxu0 0.0
    %578 = vmatpush2.msra.mxu0 0.0
    %579 = vmatprep.subr.mxu0 0.0
    %580 = vmatpush2.msra.mxu0 0.0
    %581 = vmatprep.subr.mxu0 0.0
    %582 = vmatpush2.msra.mxu0 0.0
    %583 = vmatprep.subr.mxu0 0.0
    %584 = vmatpush2.msra.mxu0 0.0
    %585 = vmatprep.subr.mxu0 0.0
    %586 = vmatpush2.msra.mxu0 0.0
    %587 = vmatprep.mubr.f32.mxu0 0.0
    %588 = vmatmul.mubr.f32.gmra.mxu0 %v521
    %v589 = vpop.f32.mrf.mxu0
    %v590 = vadd.f32 0.0, %v589
    %v591 = vpop.f32.mrf.mxu0
    %592 = vdwg.mxu0
    %v593 = vadd.f32 %v135, %v590
    %v594 = vtanh.pop %v593
    %595 = vst.msk [vmem:[#allocation2 + $0x14] sm:$0xf] %vm214, %v594
    %v597 = vsel %vm138, %v594, 0
    %599 = vmatprep.subr.mxu0 0.0
    %600 = vmatpush1.msra.mxu0 0.0
    %601 = vmatprep.subr.mxu0 0.0
    %602 = vmatpush1.msra.mxu0 0.0
    %603 = vmatprep.subr.mxu0 0.0
    %604 = vmatpush1.msra.mxu0 0.0
    %605 = vmatprep.subr.mxu0 0.0
    %606 = vmatpush1.msra.mxu0 0.0
    %607 = vmatprep.subr.mxu0 0.0
    %608 = vmatpush1.msra.mxu0 0.0
    %609 = vmatprep.subr.mxu0 0.0
    %610 = vmatpush1.msra.mxu0 0.0
    %611 = vmatprep.subr.mxu0 0.0
    %612 = vmatpush1.msra.mxu0 0.0
    %613 = vmatprep.subr.mxu0 0.0
    %614 = vmatpush1.msra.mxu0 0.0
    %615 = vmatprep.subr.mxu0 0.0
    %616 = vmatpush1.msra.mxu0 %v47
    %617 = vmatprep.subr.mxu0 0.0
    %618 = vmatpush1.msra.mxu0 %v46
    %619 = vmatprep.subr.mxu0 0.0
    %620 = vmatpush1.msra.mxu0 %v45
    %621 = vmatprep.subr.mxu0 0.0
    %622 = vmatpush1.msra.mxu0 %v44
    %623 = vmatprep.subr.mxu0 0.0
    %624 = vmatpush1.msra.mxu0 %v43
    %625 = vmatprep.subr.mxu0 0.0
    %626 = vmatpush1.msra.mxu0 %v42
    %627 = vmatprep.subr.mxu0 0.0
    %628 = vmatpush1.msra.mxu0 %v41
    %629 = vmatprep.subr.mxu0 0.0
    %630 = vmatpush1.msra.mxu0 %v40
    %631 = vmatprep.subr.mxu0 0.0
    %632 = vmatpush2.msra.mxu0 0.0
    %633 = vmatprep.subr.mxu0 0.0
    %634 = vmatpush2.msra.mxu0 0.0
    %635 = vmatprep.subr.mxu0 0.0
    %636 = vmatpush2.msra.mxu0 0.0
    %637 = vmatprep.subr.mxu0 0.0
    %638 = vmatpush2.msra.mxu0 0.0
    %639 = vmatprep.subr.mxu0 0.0
    %640 = vmatpush2.msra.mxu0 0.0
    %641 = vmatprep.subr.mxu0 0.0
    %642 = vmatpush2.msra.mxu0 0.0
    %643 = vmatprep.subr.mxu0 0.0
    %644 = vmatpush2.msra.mxu0 0.0
    %645 = vmatprep.subr.mxu0 0.0
    %646 = vmatpush2.msra.mxu0 0.0
    %647 = vmatprep.subr.mxu0 0.0
    %648 = vmatpush2.msra.mxu0 0.0
    %649 = vmatprep.subr.mxu0 0.0
    %650 = vmatpush2.msra.mxu0 0.0
    %651 = vmatprep.subr.mxu0 0.0
    %652 = vmatpush2.msra.mxu0 0.0
    %653 = vmatprep.subr.mxu0 0.0
    %654 = vmatpush2.msra.mxu0 0.0
    %655 = vmatprep.subr.mxu0 0.0
    %656 = vmatpush2.msra.mxu0 0.0
    %657 = vmatprep.subr.mxu0 0.0
    %658 = vmatpush2.msra.mxu0 0.0
    %659 = vmatprep.subr.mxu0 0.0
    %660 = vmatpush2.msra.mxu0 0.0
    %661 = vmatprep.subr.mxu0 0.0
    %662 = vmatpush2.msra.mxu0 0.0
    %663 = vmatprep.mubr.f32.mxu0 0.0
    %664 = vmatmul.mubr.f32.gmra.mxu0 %v597
    %v665 = vpop.f32.mrf.mxu0
    %v666 = vadd.f32 0.0, %v665
    %v667 = vpop.f32.mrf.mxu0
    %668 = vdwg.mxu0
    %v669 = vadd.f32 %v135, %v666
    %v670 = vtanh.pop %v669
    %671 = vst.msk [vmem:[#allocation2 + $0x18] sm:$0xf] %vm214, %v670
    %v673 = vsel %vm138, %v670, 0
    %675 = vmatprep.subr.mxu0 0.0
    %676 = vmatpush1.msra.mxu0 0.0
    %677 = vmatprep.subr.mxu0 0.0
    %678 = vmatpush1.msra.mxu0 0.0
    %679 = vmatprep.subr.mxu0 0.0
    %680 = vmatpush1.msra.mxu0 0.0
    %681 = vmatprep.subr.mxu0 0.0
    %682 = vmatpush1.msra.mxu0 0.0
    %683 = vmatprep.subr.mxu0 0.0
    %684 = vmatpush1.msra.mxu0 0.0
    %685 = vmatprep.subr.mxu0 0.0
    %686 = vmatpush1.msra.mxu0 0.0
    %687 = vmatprep.subr.mxu0 0.0
    %688 = vmatpush1.msra.mxu0 0.0
    %689 = vmatprep.subr.mxu0 0.0
    %690 = vmatpush1.msra.mxu0 0.0
    %691 = vmatprep.subr.mxu0 0.0
    %692 = vmatpush1.msra.mxu0 %v47
    %693 = vmatprep.subr.mxu0 0.0
    %694 = vmatpush1.msra.mxu0 %v46
    %695 = vmatprep.subr.mxu0 0.0
    %696 = vmatpush1.msra.mxu0 %v45
    %697 = vmatprep.subr.mxu0 0.0
    %698 = vmatpush1.msra.mxu0 %v44
    %699 = vmatprep.subr.mxu0 0.0
    %700 = vmatpush1.msra.mxu0 %v43
    %701 = vmatprep.subr.mxu0 0.0
    %702 = vmatpush1.msra.mxu0 %v42
    %703 = vmatprep.subr.mxu0 0.0
    %704 = vmatpush1.msra.mxu0 %v41
    %705 = vmatprep.subr.mxu0 0.0
    %706 = vmatpush1.msra.mxu0 %v40
    %707 = vmatprep.subr.mxu0 0.0
    %708 = vmatpush2.msra.mxu0 0.0
    %709 = vmatprep.subr.mxu0 0.0
    %710 = vmatpush2.msra.mxu0 0.0
    %711 = vmatprep.subr.mxu0 0.0
    %712 = vmatpush2.msra.mxu0 0.0
    %713 = vmatprep.subr.mxu0 0.0
    %714 = vmatpush2.msra.mxu0 0.0
    %715 = vmatprep.subr.mxu0 0.0
    %716 = vmatpush2.msra.mxu0 0.0
    %717 = vmatprep.subr.mxu0 0.0
    %718 = vmatpush2.msra.mxu0 0.0
    %719 = vmatprep.subr.mxu0 0.0
    %720 = vmatpush2.msra.mxu0 0.0
    %721 = vmatprep.subr.mxu0 0.0
    %722 = vmatpush2.msra.mxu0 0.0
    %723 = vmatprep.subr.mxu0 0.0
    %724 = vmatpush2.msra.mxu0 0.0
    %725 = vmatprep.subr.mxu0 0.0
    %726 = vmatpush2.msra.mxu0 0.0
    %727 = vmatprep.subr.mxu0 0.0
    %728 = vmatpush2.msra.mxu0 0.0
    %729 = vmatprep.subr.mxu0 0.0
    %730 = vmatpush2.msra.mxu0 0.0
    %731 = vmatprep.subr.mxu0 0.0
    %732 = vmatpush2.msra.mxu0 0.0
    %733 = vmatprep.subr.mxu0 0.0
    %734 = vmatpush2.msra.mxu0 0.0
    %735 = vmatprep.subr.mxu0 0.0
    %736 = vmatpush2.msra.mxu0 0.0
    %737 = vmatprep.subr.mxu0 0.0
    %738 = vmatpush2.msra.mxu0 0.0
    %739 = vmatprep.mubr.f32.mxu0 0.0
    %740 = vmatmul.mubr.f32.gmra.mxu0 %v673
    %v741 = vpop.f32.mrf.mxu0
    %v742 = vadd.f32 0.0, %v741
    %v743 = vpop.f32.mrf.mxu0
    %744 = vdwg.mxu0
    %v745 = vadd.f32 %v135, %v742
    %v746 = vtanh.pop %v745
    %747 = vst.msk [vmem:[#allocation2 + $0x1c] sm:$0xf] %vm214, %v746
    %v749 = vsel %vm138, %v746, 0
    %751 = vmatprep.subr.mxu0 0.0
    %752 = vmatpush1.msra.mxu0 0.0
    %753 = vmatprep.subr.mxu0 0.0
    %754 = vmatpush1.msra.mxu0 0.0
    %755 = vmatprep.subr.mxu0 0.0
    %756 = vmatpush1.msra.mxu0 0.0
    %757 = vmatprep.subr.mxu0 0.0
    %758 = vmatpush1.msra.mxu0 0.0
    %759 = vmatprep.subr.mxu0 0.0
    %760 = vmatpush1.msra.mxu0 0.0
    %761 = vmatprep.subr.mxu0 0.0
    %762 = vmatpush1.msra.mxu0 0.0
    %763 = vmatprep.subr.mxu0 0.0
    %764 = vmatpush1.msra.mxu0 0.0
    %765 = vmatprep.subr.mxu0 0.0
    %766 = vmatpush1.msra.mxu0 0.0
    %767 = vmatprep.subr.mxu0 0.0
    %768 = vmatpush1.msra.mxu0 %v47
    %769 = vmatprep.subr.mxu0 0.0
    %770 = vmatpush1.msra.mxu0 %v46
    %771 = vmatprep.subr.mxu0 0.0
    %772 = vmatpush1.msra.mxu0 %v45
    %773 = vmatprep.subr.mxu0 0.0
    %774 = vmatpush1.msra.mxu0 %v44
    %775 = vmatprep.subr.mxu0 0.0
    %776 = vmatpush1.msra.mxu0 %v43
    %777 = vmatprep.subr.mxu0 0.0
    %778 = vmatpush1.msra.mxu0 %v42
    %779 = vmatprep.subr.mxu0 0.0
    %780 = vmatpush1.msra.mxu0 %v41
    %781 = vmatprep.subr.mxu0 0.0
    %782 = vmatpush1.msra.mxu0 %v40
    %783 = vmatprep.subr.mxu0 0.0
    %784 = vmatpush2.msra.mxu0 0.0
    %785 = vmatprep.subr.mxu0 0.0
    %786 = vmatpush2.msra.mxu0 0.0
    %787 = vmatprep.subr.mxu0 0.0
    %788 = vmatpush2.msra.mxu0 0.0
    %789 = vmatprep.subr.mxu0 0.0
    %790 = vmatpush2.msra.mxu0 0.0
    %791 = vmatprep.subr.mxu0 0.0
    %792 = vmatpush2.msra.mxu0 0.0
    %793 = vmatprep.subr.mxu0 0.0
    %794 = vmatpush2.msra.mxu0 0.0
    %795 = vmatprep.subr.mxu0 0.0
    %796 = vmatpush2.msra.mxu0 0.0
    %797 = vmatprep.subr.mxu0 0.0
    %798 = vmatpush2.msra.mxu0 0.0
    %799 = vmatprep.subr.mxu0 0.0
    %800 = vmatpush2.msra.mxu0 0.0
    %801 = vmatprep.subr.mxu0 0.0
    %802 = vmatpush2.msra.mxu0 0.0
    %803 = vmatprep.subr.mxu0 0.0
    %804 = vmatpush2.msra.mxu0 0.0
    %805 = vmatprep.subr.mxu0 0.0
    %806 = vmatpush2.msra.mxu0 0.0
    %807 = vmatprep.subr.mxu0 0.0
    %808 = vmatpush2.msra.mxu0 0.0
    %809 = vmatprep.subr.mxu0 0.0
    %810 = vmatpush2.msra.mxu0 0.0
    %811 = vmatprep.subr.mxu0 0.0
    %812 = vmatpush2.msra.mxu0 0.0
    %813 = vmatprep.subr.mxu0 0.0
    %814 = vmatpush2.msra.mxu0 0.0
    %815 = vmatprep.mubr.f32.mxu0 0.0
    %816 = vmatmul.mubr.f32.gmra.mxu0 %v749
    %v817 = vpop.f32.mrf.mxu0
    %v818 = vadd.f32 0.0, %v817
    %v819 = vpop.f32.mrf.mxu0
    %820 = vdwg.mxu0
    %v821 = vadd.f32 %v135, %v818
    %v822 = vtanh.pop %v821
    %823 = vst.msk [vmem:[#allocation2 + $0x20] sm:$0xf] %vm214, %v822
    %v825 = vsel %vm138, %v822, 0
    %827 = vmatprep.subr.mxu0 0.0
    %828 = vmatpush1.msra.mxu0 0.0
    %829 = vmatprep.subr.mxu0 0.0
    %830 = vmatpush1.msra.mxu0 0.0
    %831 = vmatprep.subr.mxu0 0.0
    %832 = vmatpush1.msra.mxu0 0.0
    %833 = vmatprep.subr.mxu0 0.0
    %834 = vmatpush1.msra.mxu0 0.0
    %835 = vmatprep.subr.mxu0 0.0
    %836 = vmatpush1.msra.mxu0 0.0
    %837 = vmatprep.subr.mxu0 0.0
    %838 = vmatpush1.msra.mxu0 0.0
    %839 = vmatprep.subr.mxu0 0.0
    %840 = vmatpush1.msra.mxu0 0.0
    %841 = vmatprep.subr.mxu0 0.0
    %842 = vmatpush1.msra.mxu0 0.0
    %843 = vmatprep.subr.mxu0 0.0
    %844 = vmatpush1.msra.mxu0 %v47
    %845 = vmatprep.subr.mxu0 0.0
    %846 = vmatpush1.msra.mxu0 %v46
    %847 = vmatprep.subr.mxu0 0.0
    %848 = vmatpush1.msra.mxu0 %v45
    %849 = vmatprep.subr.mxu0 0.0
    %850 = vmatpush1.msra.mxu0 %v44
    %851 = vmatprep.subr.mxu0 0.0
    %852 = vmatpush1.msra.mxu0 %v43
    %853 = vmatprep.subr.mxu0 0.0
    %854 = vmatpush1.msra.mxu0 %v42
    %855 = vmatprep.subr.mxu0 0.0
    %856 = vmatpush1.msra.mxu0 %v41
    %857 = vmatprep.subr.mxu0 0.0
    %858 = vmatpush1.msra.mxu0 %v40
    %859 = vmatprep.subr.mxu0 0.0
    %860 = vmatpush2.msra.mxu0 0.0
    %861 = vmatprep.subr.mxu0 0.0
    %862 = vmatpush2.msra.mxu0 0.0
    %863 = vmatprep.subr.mxu0 0.0
    %864 = vmatpush2.msra.mxu0 0.0
    %865 = vmatprep.subr.mxu0 0.0
    %866 = vmatpush2.msra.mxu0 0.0
    %867 = vmatprep.subr.mxu0 0.0
    %868 = vmatpush2.msra.mxu0 0.0
    %869 = vmatprep.subr.mxu0 0.0
    %870 = vmatpush2.msra.mxu0 0.0
    %871 = vmatprep.subr.mxu0 0.0
    %872 = vmatpush2.msra.mxu0 0.0
    %873 = vmatprep.subr.mxu0 0.0
    %874 = vmatpush2.msra.mxu0 0.0
    %875 = vmatprep.subr.mxu0 0.0
    %876 = vmatpush2.msra.mxu0 0.0
    %877 = vmatprep.subr.mxu0 0.0
    %878 = vmatpush2.msra.mxu0 0.0
    %879 = vmatprep.subr.mxu0 0.0
    %880 = vmatpush2.msra.mxu0 0.0
    %881 = vmatprep.subr.mxu0 0.0
    %882 = vmatpush2.msra.mxu0 0.0
    %883 = vmatprep.subr.mxu0 0.0
    %884 = vmatpush2.msra.mxu0 0.0
    %885 = vmatprep.subr.mxu0 0.0
    %886 = vmatpush2.msra.mxu0 0.0
    %887 = vmatprep.subr.mxu0 0.0
    %888 = vmatpush2.msra.mxu0 0.0
    %889 = vmatprep.subr.mxu0 0.0
    %890 = vmatpush2.msra.mxu0 0.0
    %891 = vmatprep.mubr.f32.mxu0 0.0
    %892 = vmatmul.mubr.f32.gmra.mxu0 %v825
    %v893 = vpop.f32.mrf.mxu0
    %v894 = vadd.f32 0.0, %v893
    %v895 = vpop.f32.mrf.mxu0
    %896 = vdwg.mxu0
    %v897 = vadd.f32 %v135, %v894
    %v898 = vtanh.pop %v897
    %899 = vst.msk [vmem:[#allocation2 + $0x24] sm:$0xf] %vm214, %v898
    %v901 = vsel %vm138, %v898, 0
    %903 = vmatprep.subr.mxu0 0.0
    %904 = vmatpush1.msra.mxu0 0.0
    %905 = vmatprep.subr.mxu0 0.0
    %906 = vmatpush1.msra.mxu0 0.0
    %907 = vmatprep.subr.mxu0 0.0
    %908 = vmatpush1.msra.mxu0 0.0
    %909 = vmatprep.subr.mxu0 0.0
    %910 = vmatpush1.msra.mxu0 0.0
    %911 = vmatprep.subr.mxu0 0.0
    %912 = vmatpush1.msra.mxu0 0.0
    %913 = vmatprep.subr.mxu0 0.0
    %914 = vmatpush1.msra.mxu0 0.0
    %915 = vmatprep.subr.mxu0 0.0
    %916 = vmatpush1.msra.mxu0 0.0
    %917 = vmatprep.subr.mxu0 0.0
    %918 = vmatpush1.msra.mxu0 0.0
    %919 = vmatprep.subr.mxu0 0.0
    %920 = vmatpush1.msra.mxu0 %v47
    %921 = vmatprep.subr.mxu0 0.0
    %922 = vmatpush1.msra.mxu0 %v46
    %923 = vmatprep.subr.mxu0 0.0
    %924 = vmatpush1.msra.mxu0 %v45
    %925 = vmatprep.subr.mxu0 0.0
    %926 = vmatpush1.msra.mxu0 %v44
    %927 = vmatprep.subr.mxu0 0.0
    %928 = vmatpush1.msra.mxu0 %v43
    %929 = vmatprep.subr.mxu0 0.0
    %930 = vmatpush1.msra.mxu0 %v42
    %931 = vmatprep.subr.mxu0 0.0
    %932 = vmatpush1.msra.mxu0 %v41
    %933 = vmatprep.subr.mxu0 0.0
    %934 = vmatpush1.msra.mxu0 %v40
    %935 = vmatprep.subr.mxu0 0.0
    %936 = vmatpush2.msra.mxu0 0.0
    %937 = vmatprep.subr.mxu0 0.0
    %938 = vmatpush2.msra.mxu0 0.0
    %939 = vmatprep.subr.mxu0 0.0
    %940 = vmatpush2.msra.mxu0 0.0
    %941 = vmatprep.subr.mxu0 0.0
    %942 = vmatpush2.msra.mxu0 0.0
    %943 = vmatprep.subr.mxu0 0.0
    %944 = vmatpush2.msra.mxu0 0.0
    %945 = vmatprep.subr.mxu0 0.0
    %946 = vmatpush2.msra.mxu0 0.0
    %947 = vmatprep.subr.mxu0 0.0
    %948 = vmatpush2.msra.mxu0 0.0
    %949 = vmatprep.subr.mxu0 0.0
    %950 = vmatpush2.msra.mxu0 0.0
    %951 = vmatprep.subr.mxu0 0.0
    %952 = vmatpush2.msra.mxu0 0.0
    %953 = vmatprep.subr.mxu0 0.0
    %954 = vmatpush2.msra.mxu0 0.0
    %955 = vmatprep.subr.mxu0 0.0
    %956 = vmatpush2.msra.mxu0 0.0
    %957 = vmatprep.subr.mxu0 0.0
    %958 = vmatpush2.msra.mxu0 0.0
    %959 = vmatprep.subr.mxu0 0.0
    %960 = vmatpush2.msra.mxu0 0.0
    %961 = vmatprep.subr.mxu0 0.0
    %962 = vmatpush2.msra.mxu0 0.0
    %963 = vmatprep.subr.mxu0 0.0
    %964 = vmatpush2.msra.mxu0 0.0
    %965 = vmatprep.subr.mxu0 0.0
    %966 = vmatpush2.msra.mxu0 0.0
    %967 = vmatprep.mubr.f32.mxu0 0.0
    %968 = vmatmul.mubr.f32.gmra.mxu0 %v901
    %v969 = vpop.f32.mrf.mxu0
    %v970 = vadd.f32 0.0, %v969
    %v971 = vpop.f32.mrf.mxu0
    %972 = vdwg.mxu0
    %v973 = vadd.f32 %v135, %v970
    %v974 = vtanh.pop %v973
    %975 = vst.msk [vmem:[#allocation2 + $0x28] sm:$0xf] %vm214, %v974
    %v977 = vsel %vm138, %v974, 0
    %979 = vmatprep.subr.mxu0 0.0
    %980 = vmatpush1.msra.mxu0 0.0
    %981 = vmatprep.subr.mxu0 0.0
    %982 = vmatpush1.msra.mxu0 0.0
    %983 = vmatprep.subr.mxu0 0.0
    %984 = vmatpush1.msra.mxu0 0.0
    %985 = vmatprep.subr.mxu0 0.0
    %986 = vmatpush1.msra.mxu0 0.0
    %987 = vmatprep.subr.mxu0 0.0
    %988 = vmatpush1.msra.mxu0 0.0
    %989 = vmatprep.subr.mxu0 0.0
    %990 = vmatpush1.msra.mxu0 0.0
    %991 = vmatprep.subr.mxu0 0.0
    %992 = vmatpush1.msra.mxu0 0.0
    %993 = vmatprep.subr.mxu0 0.0
    %994 = vmatpush1.msra.mxu0 0.0
    %995 = vmatprep.subr.mxu0 0.0
    %996 = vmatpush1.msra.mxu0 %v47
    %997 = vmatprep.subr.mxu0 0.0
    %998 = vmatpush1.msra.mxu0 %v46
    %999 = vmatprep.subr.mxu0 0.0
    %1000 = vmatpush1.msra.mxu0 %v45
    %1001 = vmatprep.subr.mxu0 0.0
    %1002 = vmatpush1.msra.mxu0 %v44
    %1003 = vmatprep.subr.mxu0 0.0
    %1004 = vmatpush1.msra.mxu0 %v43
    %1005 = vmatprep.subr.mxu0 0.0
    %1006 = vmatpush1.msra.mxu0 %v42
    %1007 = vmatprep.subr.mxu0 0.0
    %1008 = vmatpush1.msra.mxu0 %v41
    %1009 = vmatprep.subr.mxu0 0.0
    %1010 = vmatpush1.msra.mxu0 %v40
    %1011 = vmatprep.subr.mxu0 0.0
    %1012 = vmatpush2.msra.mxu0 0.0
    %1013 = vmatprep.subr.mxu0 0.0
    %1014 = vmatpush2.msra.mxu0 0.0
    %1015 = vmatprep.subr.mxu0 0.0
    %1016 = vmatpush2.msra.mxu0 0.0
    %1017 = vmatprep.subr.mxu0 0.0
    %1018 = vmatpush2.msra.mxu0 0.0
    %1019 = vmatprep.subr.mxu0 0.0
    %1020 = vmatpush2.msra.mxu0 0.0
    %1021 = vmatprep.subr.mxu0 0.0
    %1022 = vmatpush2.msra.mxu0 0.0
    %1023 = vmatprep.subr.mxu0 0.0
    %1024 = vmatpush2.msra.mxu0 0.0
    %1025 = vmatprep.subr.mxu0 0.0
    %1026 = vmatpush2.msra.mxu0 0.0
    %1027 = vmatprep.subr.mxu0 0.0
    %1028 = vmatpush2.msra.mxu0 0.0
    %1029 = vmatprep.subr.mxu0 0.0
    %1030 = vmatpush2.msra.mxu0 0.0
    %1031 = vmatprep.subr.mxu0 0.0
    %1032 = vmatpush2.msra.mxu0 0.0
    %1033 = vmatprep.subr.mxu0 0.0
    %1034 = vmatpush2.msra.mxu0 0.0
    %1035 = vmatprep.subr.mxu0 0.0
    %1036 = vmatpush2.msra.mxu0 0.0
    %1037 = vmatprep.subr.mxu0 0.0
    %1038 = vmatpush2.msra.mxu0 0.0
    %1039 = vmatprep.subr.mxu0 0.0
    %1040 = vmatpush2.msra.mxu0 0.0
    %1041 = vmatprep.subr.mxu0 0.0
    %1042 = vmatpush2.msra.mxu0 0.0
    %1043 = vmatprep.mubr.f32.mxu0 0.0
    %1044 = vmatmul.mubr.f32.gmra.mxu0 %v977
    %v1045 = vpop.f32.mrf.mxu0
    %v1046 = vadd.f32 0.0, %v1045
    %v1047 = vpop.f32.mrf.mxu0
    %1048 = vdwg.mxu0
    %v1049 = vadd.f32 %v135, %v1046
    %v1050 = vtanh.pop %v1049
    %1051 = vst.msk [vmem:[#allocation2 + $0x2c] sm:$0xf] %vm214, %v1050
    %v1053 = vsel %vm138, %v1050, 0
    %1055 = vmatprep.subr.mxu0 0.0
    %1056 = vmatpush1.msra.mxu0 0.0
    %1057 = vmatprep.subr.mxu0 0.0
    %1058 = vmatpush1.msra.mxu0 0.0
    %1059 = vmatprep.subr.mxu0 0.0
    %1060 = vmatpush1.msra.mxu0 0.0
    %1061 = vmatprep.subr.mxu0 0.0
    %1062 = vmatpush1.msra.mxu0 0.0
    %1063 = vmatprep.subr.mxu0 0.0
    %1064 = vmatpush1.msra.mxu0 0.0
    %1065 = vmatprep.subr.mxu0 0.0
    %1066 = vmatpush1.msra.mxu0 0.0
    %1067 = vmatprep.subr.mxu0 0.0
    %1068 = vmatpush1.msra.mxu0 0.0
    %1069 = vmatprep.subr.mxu0 0.0
    %1070 = vmatpush1.msra.mxu0 0.0
    %1071 = vmatprep.subr.mxu0 0.0
    %1072 = vmatpush1.msra.mxu0 %v47
    %1073 = vmatprep.subr.mxu0 0.0
    %1074 = vmatpush1.msra.mxu0 %v46
    %1075 = vmatprep.subr.mxu0 0.0
    %1076 = vmatpush1.msra.mxu0 %v45
    %1077 = vmatprep.subr.mxu0 0.0
    %1078 = vmatpush1.msra.mxu0 %v44
    %1079 = vmatprep.subr.mxu0 0.0
    %1080 = vmatpush1.msra.mxu0 %v43
    %1081 = vmatprep.subr.mxu0 0.0
    %1082 = vmatpush1.msra.mxu0 %v42
    %1083 = vmatprep.subr.mxu0 0.0
    %1084 = vmatpush1.msra.mxu0 %v41
    %1085 = vmatprep.subr.mxu0 0.0
    %1086 = vmatpush1.msra.mxu0 %v40
    %1087 = vmatprep.subr.mxu0 0.0
    %1088 = vmatpush2.msra.mxu0 0.0
    %1089 = vmatprep.subr.mxu0 0.0
    %1090 = vmatpush2.msra.mxu0 0.0
    %1091 = vmatprep.subr.mxu0 0.0
    %1092 = vmatpush2.msra.mxu0 0.0
    %1093 = vmatprep.subr.mxu0 0.0
    %1094 = vmatpush2.msra.mxu0 0.0
    %1095 = vmatprep.subr.mxu0 0.0
    %1096 = vmatpush2.msra.mxu0 0.0
    %1097 = vmatprep.subr.mxu0 0.0
    %1098 = vmatpush2.msra.mxu0 0.0
    %1099 = vmatprep.subr.mxu0 0.0
    %1100 = vmatpush2.msra.mxu0 0.0
    %1101 = vmatprep.subr.mxu0 0.0
    %1102 = vmatpush2.msra.mxu0 0.0
    %1103 = vmatprep.subr.mxu0 0.0
    %1104 = vmatpush2.msra.mxu0 0.0
    %1105 = vmatprep.subr.mxu0 0.0
    %1106 = vmatpush2.msra.mxu0 0.0
    %1107 = vmatprep.subr.mxu0 0.0
    %1108 = vmatpush2.msra.mxu0 0.0
    %1109 = vmatprep.subr.mxu0 0.0
    %1110 = vmatpush2.msra.mxu0 0.0
    %1111 = vmatprep.subr.mxu0 0.0
    %1112 = vmatpush2.msra.mxu0 0.0
    %1113 = vmatprep.subr.mxu0 0.0
    %1114 = vmatpush2.msra.mxu0 0.0
    %1115 = vmatprep.subr.mxu0 0.0
    %1116 = vmatpush2.msra.mxu0 0.0
    %1117 = vmatprep.subr.mxu0 0.0
    %1118 = vmatpush2.msra.mxu0 0.0
    %1119 = vmatprep.mubr.f32.mxu0 0.0
    %1120 = vmatmul.mubr.f32.gmra.mxu0 %v1053
    %v1121 = vpop.f32.mrf.mxu0
    %v1122 = vadd.f32 0.0, %v1121
    %v1123 = vpop.f32.mrf.mxu0
    %1124 = vdwg.mxu0
    %v1125 = vadd.f32 %v135, %v1122
    %v1126 = vtanh.pop %v1125
    %1127 = vst.msk [vmem:[#allocation2 + $0x30] sm:$0xf] %vm214, %v1126
    %v1129 = vsel %vm138, %v1126, 0
    %1131 = vmatprep.subr.mxu0 0.0
    %1132 = vmatpush1.msra.mxu0 0.0
    %1133 = vmatprep.subr.mxu0 0.0
    %1134 = vmatpush1.msra.mxu0 0.0
    %1135 = vmatprep.subr.mxu0 0.0
    %1136 = vmatpush1.msra.mxu0 0.0
    %1137 = vmatprep.subr.mxu0 0.0
    %1138 = vmatpush1.msra.mxu0 0.0
    %1139 = vmatprep.subr.mxu0 0.0
    %1140 = vmatpush1.msra.mxu0 0.0
    %1141 = vmatprep.subr.mxu0 0.0
    %1142 = vmatpush1.msra.mxu0 0.0
    %1143 = vmatprep.subr.mxu0 0.0
    %1144 = vmatpush1.msra.mxu0 0.0
    %1145 = vmatprep.subr.mxu0 0.0
    %1146 = vmatpush1.msra.mxu0 0.0
    %1147 = vmatprep.subr.mxu0 0.0
    %1148 = vmatpush1.msra.mxu0 %v47
    %1149 = vmatprep.subr.mxu0 0.0
    %1150 = vmatpush1.msra.mxu0 %v46
    %1151 = vmatprep.subr.mxu0 0.0
    %1152 = vmatpush1.msra.mxu0 %v45
    %1153 = vmatprep.subr.mxu0 0.0
    %1154 = vmatpush1.msra.mxu0 %v44
    %1155 = vmatprep.subr.mxu0 0.0
    %1156 = vmatpush1.msra.mxu0 %v43
    %1157 = vmatprep.subr.mxu0 0.0
    %1158 = vmatpush1.msra.mxu0 %v42
    %1159 = vmatprep.subr.mxu0 0.0
    %1160 = vmatpush1.msra.mxu0 %v41
    %1161 = vmatprep.subr.mxu0 0.0
    %1162 = vmatpush1.msra.mxu0 %v40
    %1163 = vmatprep.subr.mxu0 0.0
    %1164 = vmatpush2.msra.mxu0 0.0
    %1165 = vmatprep.subr.mxu0 0.0
    %1166 = vmatpush2.msra.mxu0 0.0
    %1167 = vmatprep.subr.mxu0 0.0
    %1168 = vmatpush2.msra.mxu0 0.0
    %1169 = vmatprep.subr.mxu0 0.0
    %1170 = vmatpush2.msra.mxu0 0.0
    %1171 = vmatprep.subr.mxu0 0.0
    %1172 = vmatpush2.msra.mxu0 0.0
    %1173 = vmatprep.subr.mxu0 0.0
    %1174 = vmatpush2.msra.mxu0 0.0
    %1175 = vmatprep.subr.mxu0 0.0
    %1176 = vmatpush2.msra.mxu0 0.0
    %1177 = vmatprep.subr.mxu0 0.0
    %1178 = vmatpush2.msra.mxu0 0.0
    %1179 = vmatprep.subr.mxu0 0.0
    %1180 = vmatpush2.msra.mxu0 0.0
    %1181 = vmatprep.subr.mxu0 0.0
    %1182 = vmatpush2.msra.mxu0 0.0
    %1183 = vmatprep.subr.mxu0 0.0
    %1184 = vmatpush2.msra.mxu0 0.0
    %1185 = vmatprep.subr.mxu0 0.0
    %1186 = vmatpush2.msra.mxu0 0.0
    %1187 = vmatprep.subr.mxu0 0.0
    %1188 = vmatpush2.msra.mxu0 0.0
    %1189 = vmatprep.subr.mxu0 0.0
    %1190 = vmatpush2.msra.mxu0 0.0
    %1191 = vmatprep.subr.mxu0 0.0
    %1192 = vmatpush2.msra.mxu0 0.0
    %1193 = vmatprep.subr.mxu0 0.0
    %1194 = vmatpush2.msra.mxu0 0.0
    %1195 = vmatprep.mubr.f32.mxu0 0.0
    %1196 = vmatmul.mubr.f32.gmra.mxu0 %v1129
    %v1197 = vpop.f32.mrf.mxu0
    %v1198 = vadd.f32 0.0, %v1197
    %v1199 = vpop.f32.mrf.mxu0
    %1200 = vdwg.mxu0
    %v1201 = vadd.f32 %v135, %v1198
    %v1202 = vtanh.pop %v1201
    %1203 = vst.msk [vmem:[#allocation2 + $0x34] sm:$0xf] %vm214, %v1202
    %v1205 = vsel %vm138, %v1202, 0
    %1207 = vmatprep.subr.mxu0 0.0
    %1208 = vmatpush1.msra.mxu0 0.0
    %1209 = vmatprep.subr.mxu0 0.0
    %1210 = vmatpush1.msra.mxu0 0.0
    %1211 = vmatprep.subr.mxu0 0.0
    %1212 = vmatpush1.msra.mxu0 0.0
    %1213 = vmatprep.subr.mxu0 0.0
    %1214 = vmatpush1.msra.mxu0 0.0
    %1215 = vmatprep.subr.mxu0 0.0
    %1216 = vmatpush1.msra.mxu0 0.0
    %1217 = vmatprep.subr.mxu0 0.0
    %1218 = vmatpush1.msra.mxu0 0.0
    %1219 = vmatprep.subr.mxu0 0.0
    %1220 = vmatpush1.msra.mxu0 0.0
    %1221 = vmatprep.subr.mxu0 0.0
    %1222 = vmatpush1.msra.mxu0 0.0
    %1223 = vmatprep.subr.mxu0 0.0
    %1224 = vmatpush1.msra.mxu0 %v47
    %1225 = vmatprep.subr.mxu0 0.0
    %1226 = vmatpush1.msra.mxu0 %v46
    %1227 = vmatprep.subr.mxu0 0.0
    %1228 = vmatpush1.msra.mxu0 %v45
    %1229 = vmatprep.subr.mxu0 0.0
    %1230 = vmatpush1.msra.mxu0 %v44
    %1231 = vmatprep.subr.mxu0 0.0
    %1232 = vmatpush1.msra.mxu0 %v43
    %1233 = vmatprep.subr.mxu0 0.0
    %1234 = vmatpush1.msra.mxu0 %v42
    %1235 = vmatprep.subr.mxu0 0.0
    %1236 = vmatpush1.msra.mxu0 %v41
    %1237 = vmatprep.subr.mxu0 0.0
    %1238 = vmatpush1.msra.mxu0 %v40
    %1239 = vmatprep.subr.mxu0 0.0
    %1240 = vmatpush2.msra.mxu0 0.0
    %1241 = vmatprep.subr.mxu0 0.0
    %1242 = vmatpush2.msra.mxu0 0.0
    %1243 = vmatprep.subr.mxu0 0.0
    %1244 = vmatpush2.msra.mxu0 0.0
    %1245 = vmatprep.subr.mxu0 0.0
    %1246 = vmatpush2.msra.mxu0 0.0
    %1247 = vmatprep.subr.mxu0 0.0
    %1248 = vmatpush2.msra.mxu0 0.0
    %1249 = vmatprep.subr.mxu0 0.0
    %1250 = vmatpush2.msra.mxu0 0.0
    %1251 = vmatprep.subr.mxu0 0.0
    %1252 = vmatpush2.msra.mxu0 0.0
    %1253 = vmatprep.subr.mxu0 0.0
    %1254 = vmatpush2.msra.mxu0 0.0
    %1255 = vmatprep.subr.mxu0 0.0
    %1256 = vmatpush2.msra.mxu0 0.0
    %1257 = vmatprep.subr.mxu0 0.0
    %1258 = vmatpush2.msra.mxu0 0.0
    %1259 = vmatprep.subr.mxu0 0.0
    %1260 = vmatpush2.msra.mxu0 0.0
    %1261 = vmatprep.subr.mxu0 0.0
    %1262 = vmatpush2.msra.mxu0 0.0
    %1263 = vmatprep.subr.mxu0 0.0
    %1264 = vmatpush2.msra.mxu0 0.0
    %1265 = vmatprep.subr.mxu0 0.0
    %1266 = vmatpush2.msra.mxu0 0.0
    %1267 = vmatprep.subr.mxu0 0.0
    %1268 = vmatpush2.msra.mxu0 0.0
    %1269 = vmatprep.subr.mxu0 0.0
    %1270 = vmatpush2.msra.mxu0 0.0
    %1271 = vmatprep.mubr.f32.mxu0 0.0
    %1272 = vmatmul.mubr.f32.gmra.mxu0 %v1205
    %v1273 = vpop.f32.mrf.mxu0
    %v1274 = vadd.f32 0.0, %v1273
    %v1275 = vpop.f32.mrf.mxu0
    %1276 = vdwg.mxu0
    %v1277 = vadd.f32 %v135, %v1274
    %v1278 = vtanh.pop %v1277
    %1279 = vst.msk [vmem:[#allocation2 + $0x38] sm:$0xf] %vm214, %v1278
    %v1281 = vsel %vm138, %v1278, 0
    %1283 = vmatprep.subr.mxu0 0.0
    %1284 = vmatpush1.msra.mxu0 0.0
    %1285 = vmatprep.subr.mxu0 0.0
    %1286 = vmatpush1.msra.mxu0 0.0
    %1287 = vmatprep.subr.mxu0 0.0
    %1288 = vmatpush1.msra.mxu0 0.0
    %1289 = vmatprep.subr.mxu0 0.0
    %1290 = vmatpush1.msra.mxu0 0.0
    %1291 = vmatprep.subr.mxu0 0.0
    %1292 = vmatpush1.msra.mxu0 0.0
    %1293 = vmatprep.subr.mxu0 0.0
    %1294 = vmatpush1.msra.mxu0 0.0
    %1295 = vmatprep.subr.mxu0 0.0
    %1296 = vmatpush1.msra.mxu0 0.0
    %1297 = vmatprep.subr.mxu0 0.0
    %1298 = vmatpush1.msra.mxu0 0.0
    %1299 = vmatprep.subr.mxu0 0.0
    %1300 = vmatpush1.msra.mxu0 %v47
    %1301 = vmatprep.subr.mxu0 0.0
    %1302 = vmatpush1.msra.mxu0 %v46
    %1303 = vmatprep.subr.mxu0 0.0
    %1304 = vmatpush1.msra.mxu0 %v45
    %1305 = vmatprep.subr.mxu0 0.0
    %1306 = vmatpush1.msra.mxu0 %v44
    %1307 = vmatprep.subr.mxu0 0.0
    %1308 = vmatpush1.msra.mxu0 %v43
    %1309 = vmatprep.subr.mxu0 0.0
    %1310 = vmatpush1.msra.mxu0 %v42
    %1311 = vmatprep.subr.mxu0 0.0
    %1312 = vmatpush1.msra.mxu0 %v41
    %1313 = vmatprep.subr.mxu0 0.0
    %1314 = vmatpush1.msra.mxu0 %v40
    %1315 = vmatprep.subr.mxu0 0.0
    %1316 = vmatpush2.msra.mxu0 0.0
    %1317 = vmatprep.subr.mxu0 0.0
    %1318 = vmatpush2.msra.mxu0 0.0
    %1319 = vmatprep.subr.mxu0 0.0
    %1320 = vmatpush2.msra.mxu0 0.0
    %1321 = vmatprep.subr.mxu0 0.0
    %1322 = vmatpush2.msra.mxu0 0.0
    %1323 = vmatprep.subr.mxu0 0.0
    %1324 = vmatpush2.msra.mxu0 0.0
    %1325 = vmatprep.subr.mxu0 0.0
    %1326 = vmatpush2.msra.mxu0 0.0
    %1327 = vmatprep.subr.mxu0 0.0
    %1328 = vmatpush2.msra.mxu0 0.0
    %1329 = vmatprep.subr.mxu0 0.0
    %1330 = vmatpush2.msra.mxu0 0.0
    %1331 = vmatprep.subr.mxu0 0.0
    %1332 = vmatpush2.msra.mxu0 0.0
    %1333 = vmatprep.subr.mxu0 0.0
    %1334 = vmatpush2.msra.mxu0 0.0
    %1335 = vmatprep.subr.mxu0 0.0
    %1336 = vmatpush2.msra.mxu0 0.0
    %1337 = vmatprep.subr.mxu0 0.0
    %1338 = vmatpush2.msra.mxu0 0.0
    %1339 = vmatprep.subr.mxu0 0.0
    %1340 = vmatpush2.msra.mxu0 0.0
    %1341 = vmatprep.subr.mxu0 0.0
    %1342 = vmatpush2.msra.mxu0 0.0
    %1343 = vmatprep.subr.mxu0 0.0
    %1344 = vmatpush2.msra.mxu0 0.0
    %1345 = vmatprep.subr.mxu0 0.0
    %1346 = vmatpush2.msra.mxu0 0.0
    %1347 = vmatprep.mubr.f32.mxu0 0.0
    %1348 = vmatmul.mubr.f32.gmra.mxu0 %v1281
    %v1349 = vpop.f32.mrf.mxu0
    %v1350 = vadd.f32 0.0, %v1349
    %v1351 = vpop.f32.mrf.mxu0
    %1352 = vdwg.mxu0
    %v1353 = vadd.f32 %v135, %v1350
    %v1354 = vtanh.pop %v1353
    %1355 = vst.msk [vmem:[#allocation2 + $0x3c] sm:$0xf] %vm214, %v1354
    %v1357 = vsel %vm138, %v1354, 0
    %1359 = vmatprep.subr.mxu0 0.0
    %1360 = vmatpush1.msra.mxu0 0.0
    %1361 = vmatprep.subr.mxu0 0.0
    %1362 = vmatpush1.msra.mxu0 0.0
    %1363 = vmatprep.subr.mxu0 0.0
    %1364 = vmatpush1.msra.mxu0 0.0
    %1365 = vmatprep.subr.mxu0 0.0
    %1366 = vmatpush1.msra.mxu0 0.0
    %1367 = vmatprep.subr.mxu0 0.0
    %1368 = vmatpush1.msra.mxu0 0.0
    %1369 = vmatprep.subr.mxu0 0.0
    %1370 = vmatpush1.msra.mxu0 0.0
    %1371 = vmatprep.subr.mxu0 0.0
    %1372 = vmatpush1.msra.mxu0 0.0
    %1373 = vmatprep.subr.mxu0 0.0
    %1374 = vmatpush1.msra.mxu0 0.0
    %1375 = vmatprep.subr.mxu0 0.0
    %1376 = vmatpush1.msra.mxu0 %v47
    %1377 = vmatprep.subr.mxu0 0.0
    %1378 = vmatpush1.msra.mxu0 %v46
    %1379 = vmatprep.subr.mxu0 0.0
    %1380 = vmatpush1.msra.mxu0 %v45
    %1381 = vmatprep.subr.mxu0 0.0
    %1382 = vmatpush1.msra.mxu0 %v44
    %1383 = vmatprep.subr.mxu0 0.0
    %1384 = vmatpush1.msra.mxu0 %v43
    %1385 = vmatprep.subr.mxu0 0.0
    %1386 = vmatpush1.msra.mxu0 %v42
    %1387 = vmatprep.subr.mxu0 0.0
    %1388 = vmatpush1.msra.mxu0 %v41
    %1389 = vmatprep.subr.mxu0 0.0
    %1390 = vmatpush1.msra.mxu0 %v40
    %1391 = vmatprep.subr.mxu0 0.0
    %1392 = vmatpush2.msra.mxu0 0.0
    %1393 = vmatprep.subr.mxu0 0.0
    %1394 = vmatpush2.msra.mxu0 0.0
    %1395 = vmatprep.subr.mxu0 0.0
    %1396 = vmatpush2.msra.mxu0 0.0
    %1397 = vmatprep.subr.mxu0 0.0
    %1398 = vmatpush2.msra.mxu0 0.0
    %1399 = vmatprep.subr.mxu0 0.0
    %1400 = vmatpush2.msra.mxu0 0.0
    %1401 = vmatprep.subr.mxu0 0.0
    %1402 = vmatpush2.msra.mxu0 0.0
    %1403 = vmatprep.subr.mxu0 0.0
    %1404 = vmatpush2.msra.mxu0 0.0
    %1405 = vmatprep.subr.mxu0 0.0
    %1406 = vmatpush2.msra.mxu0 0.0
    %1407 = vmatprep.subr.mxu0 0.0
    %1408 = vmatpush2.msra.mxu0 0.0
    %1409 = vmatprep.subr.mxu0 0.0
    %1410 = vmatpush2.msra.mxu0 0.0
    %1411 = vmatprep.subr.mxu0 0.0
    %1412 = vmatpush2.msra.mxu0 0.0
    %1413 = vmatprep.subr.mxu0 0.0
    %1414 = vmatpush2.msra.mxu0 0.0
    %1415 = vmatprep.subr.mxu0 0.0
    %1416 = vmatpush2.msra.mxu0 0.0
    %1417 = vmatprep.subr.mxu0 0.0
    %1418 = vmatpush2.msra.mxu0 0.0
    %1419 = vmatprep.subr.mxu0 0.0
    %1420 = vmatpush2.msra.mxu0 0.0
    %1421 = vmatprep.subr.mxu0 0.0
    %1422 = vmatpush2.msra.mxu0 0.0
    %1423 = vmatprep.mubr.f32.mxu0 0.0
    %1424 = vmatmul.mubr.f32.gmra.mxu0 %v1357
    %v1425 = vpop.f32.mrf.mxu0
    %v1426 = vadd.f32 0.0, %v1425
    %v1427 = vpop.f32.mrf.mxu0
    %1428 = vdwg.mxu0
    %v1429 = vadd.f32 %v135, %v1426
    %v1430 = vtanh.pop %v1429
    %1431 = vst.msk [vmem:[#allocation2 + $0x40] sm:$0xf] %vm214, %v1430
    %v1433 = vsel %vm138, %v1430, 0
    %1435 = vmatprep.subr.mxu0 0.0
    %1436 = vmatpush1.msra.mxu0 0.0
    %1437 = vmatprep.subr.mxu0 0.0
    %1438 = vmatpush1.msra.mxu0 0.0
    %1439 = vmatprep.subr.mxu0 0.0
    %1440 = vmatpush1.msra.mxu0 0.0
    %1441 = vmatprep.subr.mxu0 0.0
    %1442 = vmatpush1.msra.mxu0 0.0
    %1443 = vmatprep.subr.mxu0 0.0
    %1444 = vmatpush1.msra.mxu0 0.0
    %1445 = vmatprep.subr.mxu0 0.0
    %1446 = vmatpush1.msra.mxu0 0.0
    %1447 = vmatprep.subr.mxu0 0.0
    %1448 = vmatpush1.msra.mxu0 0.0
    %1449 = vmatprep.subr.mxu0 0.0
    %1450 = vmatpush1.msra.mxu0 0.0
    %1451 = vmatprep.subr.mxu0 0.0
    %1452 = vmatpush1.msra.mxu0 %v47
    %1453 = vmatprep.subr.mxu0 0.0
    %1454 = vmatpush1.msra.mxu0 %v46
    %1455 = vmatprep.subr.mxu0 0.0
    %1456 = vmatpush1.msra.mxu0 %v45
    %1457 = vmatprep.subr.mxu0 0.0
    %1458 = vmatpush1.msra.mxu0 %v44
    %1459 = vmatprep.subr.mxu0 0.0
    %1460 = vmatpush1.msra.mxu0 %v43
    %1461 = vmatprep.subr.mxu0 0.0
    %1462 = vmatpush1.msra.mxu0 %v42
    %1463 = vmatprep.subr.mxu0 0.0
    %1464 = vmatpush1.msra.mxu0 %v41
    %1465 = vmatprep.subr.mxu0 0.0
    %1466 = vmatpush1.msra.mxu0 %v40
    %1467 = vmatprep.subr.mxu0 0.0
    %1468 = vmatpush2.msra.mxu0 0.0
    %1469 = vmatprep.subr.mxu0 0.0
    %1470 = vmatpush2.msra.mxu0 0.0
    %1471 = vmatprep.subr.mxu0 0.0
    %1472 = vmatpush2.msra.mxu0 0.0
    %1473 = vmatprep.subr.mxu0 0.0
    %1474 = vmatpush2.msra.mxu0 0.0
    %1475 = vmatprep.subr.mxu0 0.0
    %1476 = vmatpush2.msra.mxu0 0.0
    %1477 = vmatprep.subr.mxu0 0.0
    %1478 = vmatpush2.msra.mxu0 0.0
    %1479 = vmatprep.subr.mxu0 0.0
    %1480 = vmatpush2.msra.mxu0 0.0
    %1481 = vmatprep.subr.mxu0 0.0
    %1482 = vmatpush2.msra.mxu0 0.0
    %1483 = vmatprep.subr.mxu0 0.0
    %1484 = vmatpush2.msra.mxu0 0.0
    %1485 = vmatprep.subr.mxu0 0.0
    %1486 = vmatpush2.msra.mxu0 0.0
    %1487 = vmatprep.subr.mxu0 0.0
    %1488 = vmatpush2.msra.mxu0 0.0
    %1489 = vmatprep.subr.mxu0 0.0
    %1490 = vmatpush2.msra.mxu0 0.0
    %1491 = vmatprep.subr.mxu0 0.0
    %1492 = vmatpush2.msra.mxu0 0.0
    %1493 = vmatprep.subr.mxu0 0.0
    %1494 = vmatpush2.msra.mxu0 0.0
    %1495 = vmatprep.subr.mxu0 0.0
    %1496 = vmatpush2.msra.mxu0 0.0
    %1497 = vmatprep.subr.mxu0 0.0
    %1498 = vmatpush2.msra.mxu0 0.0
    %1499 = vmatprep.mubr.f32.mxu0 0.0
    %1500 = vmatmul.mubr.f32.gmra.mxu0 %v1433
    %v1501 = vpop.f32.mrf.mxu0
    %v1502 = vadd.f32 0.0, %v1501
    %v1503 = vpop.f32.mrf.mxu0
    %1504 = vdwg.mxu0
    %v1505 = vadd.f32 %v135, %v1502
    %v1506 = vtanh.pop %v1505
    %1507 = vst.msk [vmem:[#allocation2 + $0x44] sm:$0xf] %vm214, %v1506
    %v1509 = vsel %vm138, %v1506, 0
    %1511 = vmatprep.subr.mxu0 0.0
    %1512 = vmatpush1.msra.mxu0 0.0
    %1513 = vmatprep.subr.mxu0 0.0
    %1514 = vmatpush1.msra.mxu0 0.0
    %1515 = vmatprep.subr.mxu0 0.0
    %1516 = vmatpush1.msra.mxu0 0.0
    %1517 = vmatprep.subr.mxu0 0.0
    %1518 = vmatpush1.msra.mxu0 0.0
    %1519 = vmatprep.subr.mxu0 0.0
    %1520 = vmatpush1.msra.mxu0 0.0
    %1521 = vmatprep.subr.mxu0 0.0
    %1522 = vmatpush1.msra.mxu0 0.0
    %1523 = vmatprep.subr.mxu0 0.0
    %1524 = vmatpush1.msra.mxu0 0.0
    %1525 = vmatprep.subr.mxu0 0.0
    %1526 = vmatpush1.msra.mxu0 0.0
    %1527 = vmatprep.subr.mxu0 0.0
    %1528 = vmatpush1.msra.mxu0 %v47
    %1529 = vmatprep.subr.mxu0 0.0
    %1530 = vmatpush1.msra.mxu0 %v46
    %1531 = vmatprep.subr.mxu0 0.0
    %1532 = vmatpush1.msra.mxu0 %v45
    %1533 = vmatprep.subr.mxu0 0.0
    %1534 = vmatpush1.msra.mxu0 %v44
    %1535 = vmatprep.subr.mxu0 0.0
    %1536 = vmatpush1.msra.mxu0 %v43
    %1537 = vmatprep.subr.mxu0 0.0
    %1538 = vmatpush1.msra.mxu0 %v42
    %1539 = vmatprep.subr.mxu0 0.0
    %1540 = vmatpush1.msra.mxu0 %v41
    %1541 = vmatprep.subr.mxu0 0.0
    %1542 = vmatpush1.msra.mxu0 %v40
    %1543 = vmatprep.subr.mxu0 0.0
    %1544 = vmatpush2.msra.mxu0 0.0
    %1545 = vmatprep.subr.mxu0 0.0
    %1546 = vmatpush2.msra.mxu0 0.0
    %1547 = vmatprep.subr.mxu0 0.0
    %1548 = vmatpush2.msra.mxu0 0.0
    %1549 = vmatprep.subr.mxu0 0.0
    %1550 = vmatpush2.msra.mxu0 0.0
    %1551 = vmatprep.subr.mxu0 0.0
    %1552 = vmatpush2.msra.mxu0 0.0
    %1553 = vmatprep.subr.mxu0 0.0
    %1554 = vmatpush2.msra.mxu0 0.0
    %1555 = vmatprep.subr.mxu0 0.0
    %1556 = vmatpush2.msra.mxu0 0.0
    %1557 = vmatprep.subr.mxu0 0.0
    %1558 = vmatpush2.msra.mxu0 0.0
    %1559 = vmatprep.subr.mxu0 0.0
    %1560 = vmatpush2.msra.mxu0 0.0
    %1561 = vmatprep.subr.mxu0 0.0
    %1562 = vmatpush2.msra.mxu0 0.0
    %1563 = vmatprep.subr.mxu0 0.0
    %1564 = vmatpush2.msra.mxu0 0.0
    %1565 = vmatprep.subr.mxu0 0.0
    %1566 = vmatpush2.msra.mxu0 0.0
    %1567 = vmatprep.subr.mxu0 0.0
    %1568 = vmatpush2.msra.mxu0 0.0
    %1569 = vmatprep.subr.mxu0 0.0
    %1570 = vmatpush2.msra.mxu0 0.0
    %1571 = vmatprep.subr.mxu0 0.0
    %1572 = vmatpush2.msra.mxu0 0.0
    %1573 = vmatprep.subr.mxu0 0.0
    %1574 = vmatpush2.msra.mxu0 0.0
    %1575 = vmatprep.mubr.f32.mxu0 0.0
    %1576 = vmatmul.mubr.f32.gmra.mxu0 %v1509
    %v1577 = vpop.f32.mrf.mxu0
    %v1578 = vadd.f32 0.0, %v1577
    %v1579 = vpop.f32.mrf.mxu0
    %1580 = vdwg.mxu0
    %v1581 = vadd.f32 %v135, %v1578
    %v1582 = vtanh.pop %v1581
    %1583 = vst.msk [vmem:[#allocation2 + $0x48] sm:$0xf] %vm214, %v1582
    %v1585 = vsel %vm138, %v1582, 0
    %1587 = vmatprep.subr.mxu0 0.0
    %1588 = vmatpush1.msra.mxu0 0.0
    %1589 = vmatprep.subr.mxu0 0.0
    %1590 = vmatpush1.msra.mxu0 0.0
    %1591 = vmatprep.subr.mxu0 0.0
    %1592 = vmatpush1.msra.mxu0 0.0
    %1593 = vmatprep.subr.mxu0 0.0
    %1594 = vmatpush1.msra.mxu0 0.0
    %1595 = vmatprep.subr.mxu0 0.0
    %1596 = vmatpush1.msra.mxu0 0.0
    %1597 = vmatprep.subr.mxu0 0.0
    %1598 = vmatpush1.msra.mxu0 0.0
    %1599 = vmatprep.subr.mxu0 0.0
    %1600 = vmatpush1.msra.mxu0 0.0
    %1601 = vmatprep.subr.mxu0 0.0
    %1602 = vmatpush1.msra.mxu0 0.0
    %1603 = vmatprep.subr.mxu0 0.0
    %1604 = vmatpush1.msra.mxu0 %v47
    %1605 = vmatprep.subr.mxu0 0.0
    %1606 = vmatpush1.msra.mxu0 %v46
    %1607 = vmatprep.subr.mxu0 0.0
    %1608 = vmatpush1.msra.mxu0 %v45
    %1609 = vmatprep.subr.mxu0 0.0
    %1610 = vmatpush1.msra.mxu0 %v44
    %1611 = vmatprep.subr.mxu0 0.0
    %1612 = vmatpush1.msra.mxu0 %v43
    %1613 = vmatprep.subr.mxu0 0.0
    %1614 = vmatpush1.msra.mxu0 %v42
    %1615 = vmatprep.subr.mxu0 0.0
    %1616 = vmatpush1.msra.mxu0 %v41
    %1617 = vmatprep.subr.mxu0 0.0
    %1618 = vmatpush1.msra.mxu0 %v40
    %1619 = vmatprep.subr.mxu0 0.0
    %1620 = vmatpush2.msra.mxu0 0.0
    %1621 = vmatprep.subr.mxu0 0.0
    %1622 = vmatpush2.msra.mxu0 0.0
    %1623 = vmatprep.subr.mxu0 0.0
    %1624 = vmatpush2.msra.mxu0 0.0
    %1625 = vmatprep.subr.mxu0 0.0
    %1626 = vmatpush2.msra.mxu0 0.0
    %1627 = vmatprep.subr.mxu0 0.0
    %1628 = vmatpush2.msra.mxu0 0.0
    %1629 = vmatprep.subr.mxu0 0.0
    %1630 = vmatpush2.msra.mxu0 0.0
    %1631 = vmatprep.subr.mxu0 0.0
    %1632 = vmatpush2.msra.mxu0 0.0
    %1633 = vmatprep.subr.mxu0 0.0
    %1634 = vmatpush2.msra.mxu0 0.0
    %1635 = vmatprep.subr.mxu0 0.0
    %1636 = vmatpush2.msra.mxu0 0.0
    %1637 = vmatprep.subr.mxu0 0.0
    %1638 = vmatpush2.msra.mxu0 0.0
    %1639 = vmatprep.subr.mxu0 0.0
    %1640 = vmatpush2.msra.mxu0 0.0
    %1641 = vmatprep.subr.mxu0 0.0
    %1642 = vmatpush2.msra.mxu0 0.0
    %1643 = vmatprep.subr.mxu0 0.0
    %1644 = vmatpush2.msra.mxu0 0.0
    %1645 = vmatprep.subr.mxu0 0.0
    %1646 = vmatpush2.msra.mxu0 0.0
    %1647 = vmatprep.subr.mxu0 0.0
    %1648 = vmatpush2.msra.mxu0 0.0
    %1649 = vmatprep.subr.mxu0 0.0
    %1650 = vmatpush2.msra.mxu0 0.0
    %1651 = vmatprep.mubr.f32.mxu0 0.0
    %1652 = vmatmul.mubr.f32.gmra.mxu0 %v1585
    %v1653 = vpop.f32.mrf.mxu0
    %v1654 = vadd.f32 0.0, %v1653
    %v1655 = vpop.f32.mrf.mxu0
    %1656 = vdwg.mxu0
    %v1657 = vadd.f32 %v135, %v1654
    %v1658 = vtanh.pop %v1657
    %1659 = vst.msk [vmem:[#allocation2 + $0x4c] sm:$0xf] %vm214, %v1658
    %v1661 = vsel %vm138, %v1658, 0
    %1663 = vmatprep.subr.mxu0 0.0
    %1664 = vmatpush1.msra.mxu0 0.0
    %1665 = vmatprep.subr.mxu0 0.0
    %1666 = vmatpush1.msra.mxu0 0.0
    %1667 = vmatprep.subr.mxu0 0.0
    %1668 = vmatpush1.msra.mxu0 0.0
    %1669 = vmatprep.subr.mxu0 0.0
    %1670 = vmatpush1.msra.mxu0 0.0
    %1671 = vmatprep.subr.mxu0 0.0
    %1672 = vmatpush1.msra.mxu0 0.0
    %1673 = vmatprep.subr.mxu0 0.0
    %1674 = vmatpush1.msra.mxu0 0.0
    %1675 = vmatprep.subr.mxu0 0.0
    %1676 = vmatpush1.msra.mxu0 0.0
    %1677 = vmatprep.subr.mxu0 0.0
    %1678 = vmatpush1.msra.mxu0 0.0
    %1679 = vmatprep.subr.mxu0 0.0
    %1680 = vmatpush1.msra.mxu0 %v47
    %1681 = vmatprep.subr.mxu0 0.0
    %1682 = vmatpush1.msra.mxu0 %v46
    %1683 = vmatprep.subr.mxu0 0.0
    %1684 = vmatpush1.msra.mxu0 %v45
    %1685 = vmatprep.subr.mxu0 0.0
    %1686 = vmatpush1.msra.mxu0 %v44
    %1687 = vmatprep.subr.mxu0 0.0
    %1688 = vmatpush1.msra.mxu0 %v43
    %1689 = vmatprep.subr.mxu0 0.0
    %1690 = vmatpush1.msra.mxu0 %v42
    %1691 = vmatprep.subr.mxu0 0.0
    %1692 = vmatpush1.msra.mxu0 %v41
    %1693 = vmatprep.subr.mxu0 0.0
    %1694 = vmatpush1.msra.mxu0 %v40
    %1695 = vmatprep.subr.mxu0 0.0
    %1696 = vmatpush2.msra.mxu0 0.0
    %1697 = vmatprep.subr.mxu0 0.0
    %1698 = vmatpush2.msra.mxu0 0.0
    %1699 = vmatprep.subr.mxu0 0.0
    %1700 = vmatpush2.msra.mxu0 0.0
    %1701 = vmatprep.subr.mxu0 0.0
    %1702 = vmatpush2.msra.mxu0 0.0
    %1703 = vmatprep.subr.mxu0 0.0
    %1704 = vmatpush2.msra.mxu0 0.0
    %1705 = vmatprep.subr.mxu0 0.0
    %1706 = vmatpush2.msra.mxu0 0.0
    %1707 = vmatprep.subr.mxu0 0.0
    %1708 = vmatpush2.msra.mxu0 0.0
    %1709 = vmatprep.subr.mxu0 0.0
    %1710 = vmatpush2.msra.mxu0 0.0
    %1711 = vmatprep.subr.mxu0 0.0
    %1712 = vmatpush2.msra.mxu0 0.0
    %1713 = vmatprep.subr.mxu0 0.0
    %1714 = vmatpush2.msra.mxu0 0.0
    %1715 = vmatprep.subr.mxu0 0.0
    %1716 = vmatpush2.msra.mxu0 0.0
    %1717 = vmatprep.subr.mxu0 0.0
    %1718 = vmatpush2.msra.mxu0 0.0
    %1719 = vmatprep.subr.mxu0 0.0
    %1720 = vmatpush2.msra.mxu0 0.0
    %1721 = vmatprep.subr.mxu0 0.0
    %1722 = vmatpush2.msra.mxu0 0.0
    %1723 = vmatprep.subr.mxu0 0.0
    %1724 = vmatpush2.msra.mxu0 0.0
    %1725 = vmatprep.subr.mxu0 0.0
    %1726 = vmatpush2.msra.mxu0 0.0
    %1727 = vmatprep.mubr.f32.mxu0 0.0
    %1728 = vmatmul.mubr.f32.gmra.mxu0 %v1661
    %v1729 = vpop.f32.mrf.mxu0
    %v1730 = vadd.f32 0.0, %v1729
    %v1731 = vpop.f32.mrf.mxu0
    %1732 = vdwg.mxu0
    %v1733 = vadd.f32 %v135, %v1730
    %v1734 = vtanh.pop %v1733
    %1735 = vst.msk [vmem:[#allocation2 + $0x50] sm:$0xf] %vm214, %v1734
    %v1737 = vsel %vm138, %v1734, 0
    %1739 = vmatprep.subr.mxu0 0.0
    %1740 = vmatpush1.msra.mxu0 0.0
    %1741 = vmatprep.subr.mxu0 0.0
    %1742 = vmatpush1.msra.mxu0 0.0
    %1743 = vmatprep.subr.mxu0 0.0
    %1744 = vmatpush1.msra.mxu0 0.0
    %1745 = vmatprep.subr.mxu0 0.0
    %1746 = vmatpush1.msra.mxu0 0.0
    %1747 = vmatprep.subr.mxu0 0.0
    %1748 = vmatpush1.msra.mxu0 0.0
    %1749 = vmatprep.subr.mxu0 0.0
    %1750 = vmatpush1.msra.mxu0 0.0
    %1751 = vmatprep.subr.mxu0 0.0
    %1752 = vmatpush1.msra.mxu0 0.0
    %1753 = vmatprep.subr.mxu0 0.0
    %1754 = vmatpush1.msra.mxu0 0.0
    %1755 = vmatprep.subr.mxu0 0.0
    %1756 = vmatpush1.msra.mxu0 %v47
    %1757 = vmatprep.subr.mxu0 0.0
    %1758 = vmatpush1.msra.mxu0 %v46
    %1759 = vmatprep.subr.mxu0 0.0
    %1760 = vmatpush1.msra.mxu0 %v45
    %1761 = vmatprep.subr.mxu0 0.0
    %1762 = vmatpush1.msra.mxu0 %v44
    %1763 = vmatprep.subr.mxu0 0.0
    %1764 = vmatpush1.msra.mxu0 %v43
    %1765 = vmatprep.subr.mxu0 0.0
    %1766 = vmatpush1.msra.mxu0 %v42
    %1767 = vmatprep.subr.mxu0 0.0
    %1768 = vmatpush1.msra.mxu0 %v41
    %1769 = vmatprep.subr.mxu0 0.0
    %1770 = vmatpush1.msra.mxu0 %v40
    %1771 = vmatprep.subr.mxu0 0.0
    %1772 = vmatpush2.msra.mxu0 0.0
    %1773 = vmatprep.subr.mxu0 0.0
    %1774 = vmatpush2.msra.mxu0 0.0
    %1775 = vmatprep.subr.mxu0 0.0
    %1776 = vmatpush2.msra.mxu0 0.0
    %1777 = vmatprep.subr.mxu0 0.0
    %1778 = vmatpush2.msra.mxu0 0.0
    %1779 = vmatprep.subr.mxu0 0.0
    %1780 = vmatpush2.msra.mxu0 0.0
    %1781 = vmatprep.subr.mxu0 0.0
    %1782 = vmatpush2.msra.mxu0 0.0
    %1783 = vmatprep.subr.mxu0 0.0
    %1784 = vmatpush2.msra.mxu0 0.0
    %1785 = vmatprep.subr.mxu0 0.0
    %1786 = vmatpush2.msra.mxu0 0.0
    %1787 = vmatprep.subr.mxu0 0.0
    %1788 = vmatpush2.msra.mxu0 0.0
    %1789 = vmatprep.subr.mxu0 0.0
    %1790 = vmatpush2.msra.mxu0 0.0
    %1791 = vmatprep.subr.mxu0 0.0
    %1792 = vmatpush2.msra.mxu0 0.0
    %1793 = vmatprep.subr.mxu0 0.0
    %1794 = vmatpush2.msra.mxu0 0.0
    %1795 = vmatprep.subr.mxu0 0.0
    %1796 = vmatpush2.msra.mxu0 0.0
    %1797 = vmatprep.subr.mxu0 0.0
    %1798 = vmatpush2.msra.mxu0 0.0
    %1799 = vmatprep.subr.mxu0 0.0
    %1800 = vmatpush2.msra.mxu0 0.0
    %1801 = vmatprep.subr.mxu0 0.0
    %1802 = vmatpush2.msra.mxu0 0.0
    %1803 = vmatprep.mubr.f32.mxu0 0.0
    %1804 = vmatmul.mubr.f32.gmra.mxu0 %v1737
    %v1805 = vpop.f32.mrf.mxu0
    %v1806 = vadd.f32 0.0, %v1805
    %v1807 = vpop.f32.mrf.mxu0
    %1808 = vdwg.mxu0
    %v1809 = vadd.f32 %v135, %v1806
    %v1810 = vtanh.pop %v1809
    %1811 = vst.msk [vmem:[#allocation2 + $0x54] sm:$0xf] %vm214, %v1810
    %v1813 = vsel %vm138, %v1810, 0
    %1815 = vmatprep.subr.mxu0 0.0
    %1816 = vmatpush1.msra.mxu0 0.0
    %1817 = vmatprep.subr.mxu0 0.0
    %1818 = vmatpush1.msra.mxu0 0.0
    %1819 = vmatprep.subr.mxu0 0.0
    %1820 = vmatpush1.msra.mxu0 0.0
    %1821 = vmatprep.subr.mxu0 0.0
    %1822 = vmatpush1.msra.mxu0 0.0
    %1823 = vmatprep.subr.mxu0 0.0
    %1824 = vmatpush1.msra.mxu0 0.0
    %1825 = vmatprep.subr.mxu0 0.0
    %1826 = vmatpush1.msra.mxu0 0.0
    %1827 = vmatprep.subr.mxu0 0.0
    %1828 = vmatpush1.msra.mxu0 0.0
    %1829 = vmatprep.subr.mxu0 0.0
    %1830 = vmatpush1.msra.mxu0 0.0
    %1831 = vmatprep.subr.mxu0 0.0
    %1832 = vmatpush1.msra.mxu0 %v47
    %1833 = vmatprep.subr.mxu0 0.0
    %1834 = vmatpush1.msra.mxu0 %v46
    %1835 = vmatprep.subr.mxu0 0.0
    %1836 = vmatpush1.msra.mxu0 %v45
    %1837 = vmatprep.subr.mxu0 0.0
    %1838 = vmatpush1.msra.mxu0 %v44
    %1839 = vmatprep.subr.mxu0 0.0
    %1840 = vmatpush1.msra.mxu0 %v43
    %1841 = vmatprep.subr.mxu0 0.0
    %1842 = vmatpush1.msra.mxu0 %v42
    %1843 = vmatprep.subr.mxu0 0.0
    %1844 = vmatpush1.msra.mxu0 %v41
    %1845 = vmatprep.subr.mxu0 0.0
    %1846 = vmatpush1.msra.mxu0 %v40
    %1847 = vmatprep.subr.mxu0 0.0
    %1848 = vmatpush2.msra.mxu0 0.0
    %1849 = vmatprep.subr.mxu0 0.0
    %1850 = vmatpush2.msra.mxu0 0.0
    %1851 = vmatprep.subr.mxu0 0.0
    %1852 = vmatpush2.msra.mxu0 0.0
    %1853 = vmatprep.subr.mxu0 0.0
    %1854 = vmatpush2.msra.mxu0 0.0
    %1855 = vmatprep.subr.mxu0 0.0
    %1856 = vmatpush2.msra.mxu0 0.0
    %1857 = vmatprep.subr.mxu0 0.0
    %1858 = vmatpush2.msra.mxu0 0.0
    %1859 = vmatprep.subr.mxu0 0.0
    %1860 = vmatpush2.msra.mxu0 0.0
    %1861 = vmatprep.subr.mxu0 0.0
    %1862 = vmatpush2.msra.mxu0 0.0
    %1863 = vmatprep.subr.mxu0 0.0
    %1864 = vmatpush2.msra.mxu0 0.0
    %1865 = vmatprep.subr.mxu0 0.0
    %1866 = vmatpush2.msra.mxu0 0.0
    %1867 = vmatprep.subr.mxu0 0.0
    %1868 = vmatpush2.msra.mxu0 0.0
    %1869 = vmatprep.subr.mxu0 0.0
    %1870 = vmatpush2.msra.mxu0 0.0
    %1871 = vmatprep.subr.mxu0 0.0
    %1872 = vmatpush2.msra.mxu0 0.0
    %1873 = vmatprep.subr.mxu0 0.0
    %1874 = vmatpush2.msra.mxu0 0.0
    %1875 = vmatprep.subr.mxu0 0.0
    %1876 = vmatpush2.msra.mxu0 0.0
    %1877 = vmatprep.subr.mxu0 0.0
    %1878 = vmatpush2.msra.mxu0 0.0
    %1879 = vmatprep.mubr.f32.mxu0 0.0
    %1880 = vmatmul.mubr.f32.gmra.mxu0 %v1813
    %v1881 = vpop.f32.mrf.mxu0
    %v1882 = vadd.f32 0.0, %v1881
    %v1883 = vpop.f32.mrf.mxu0
    %1884 = vdwg.mxu0
    %v1885 = vadd.f32 %v135, %v1882
    %v1886 = vtanh.pop %v1885
    %1887 = vst.msk [vmem:[#allocation2 + $0x58] sm:$0xf] %vm214, %v1886
    %v1889 = vsel %vm138, %v1886, 0
    %1891 = vmatprep.subr.mxu0 0.0
    %1892 = vmatpush1.msra.mxu0 0.0
    %1893 = vmatprep.subr.mxu0 0.0
    %1894 = vmatpush1.msra.mxu0 0.0
    %1895 = vmatprep.subr.mxu0 0.0
    %1896 = vmatpush1.msra.mxu0 0.0
    %1897 = vmatprep.subr.mxu0 0.0
    %1898 = vmatpush1.msra.mxu0 0.0
    %1899 = vmatprep.subr.mxu0 0.0
    %1900 = vmatpush1.msra.mxu0 0.0
    %1901 = vmatprep.subr.mxu0 0.0
    %1902 = vmatpush1.msra.mxu0 0.0
    %1903 = vmatprep.subr.mxu0 0.0
    %1904 = vmatpush1.msra.mxu0 0.0
    %1905 = vmatprep.subr.mxu0 0.0
    %1906 = vmatpush1.msra.mxu0 0.0
    %1907 = vmatprep.subr.mxu0 0.0
    %1908 = vmatpush1.msra.mxu0 %v47
    %1909 = vmatprep.subr.mxu0 0.0
    %1910 = vmatpush1.msra.mxu0 %v46
    %1911 = vmatprep.subr.mxu0 0.0
    %1912 = vmatpush1.msra.mxu0 %v45
    %1913 = vmatprep.subr.mxu0 0.0
    %1914 = vmatpush1.msra.mxu0 %v44
    %1915 = vmatprep.subr.mxu0 0.0
    %1916 = vmatpush1.msra.mxu0 %v43
    %1917 = vmatprep.subr.mxu0 0.0
    %1918 = vmatpush1.msra.mxu0 %v42
    %1919 = vmatprep.subr.mxu0 0.0
    %1920 = vmatpush1.msra.mxu0 %v41
    %1921 = vmatprep.subr.mxu0 0.0
    %1922 = vmatpush1.msra.mxu0 %v40
    %1923 = vmatprep.subr.mxu0 0.0
    %1924 = vmatpush2.msra.mxu0 0.0
    %1925 = vmatprep.subr.mxu0 0.0
    %1926 = vmatpush2.msra.mxu0 0.0
    %1927 = vmatprep.subr.mxu0 0.0
    %1928 = vmatpush2.msra.mxu0 0.0
    %1929 = vmatprep.subr.mxu0 0.0
    %1930 = vmatpush2.msra.mxu0 0.0
    %1931 = vmatprep.subr.mxu0 0.0
    %1932 = vmatpush2.msra.mxu0 0.0
    %1933 = vmatprep.subr.mxu0 0.0
    %1934 = vmatpush2.msra.mxu0 0.0
    %1935 = vmatprep.subr.mxu0 0.0
    %1936 = vmatpush2.msra.mxu0 0.0
    %1937 = vmatprep.subr.mxu0 0.0
    %1938 = vmatpush2.msra.mxu0 0.0
    %1939 = vmatprep.subr.mxu0 0.0
    %1940 = vmatpush2.msra.mxu0 0.0
    %1941 = vmatprep.subr.mxu0 0.0
    %1942 = vmatpush2.msra.mxu0 0.0
    %1943 = vmatprep.subr.mxu0 0.0
    %1944 = vmatpush2.msra.mxu0 0.0
    %1945 = vmatprep.subr.mxu0 0.0
    %1946 = vmatpush2.msra.mxu0 0.0
    %1947 = vmatprep.subr.mxu0 0.0
    %1948 = vmatpush2.msra.mxu0 0.0
    %1949 = vmatprep.subr.mxu0 0.0
    %1950 = vmatpush2.msra.mxu0 0.0
    %1951 = vmatprep.subr.mxu0 0.0
    %1952 = vmatpush2.msra.mxu0 0.0
    %1953 = vmatprep.subr.mxu0 0.0
    %1954 = vmatpush2.msra.mxu0 0.0
    %1955 = vmatprep.mubr.f32.mxu0 0.0
    %1956 = vmatmul.mubr.f32.gmra.mxu0 %v1889
    %v1957 = vpop.f32.mrf.mxu0
    %v1958 = vadd.f32 0.0, %v1957
    %v1959 = vpop.f32.mrf.mxu0
    %1960 = vdwg.mxu0
    %v1961 = vadd.f32 %v135, %v1958
    %v1962 = vtanh.pop %v1961
    %1963 = vst.msk [vmem:[#allocation2 + $0x5c] sm:$0xf] %vm214, %v1962
    %v1965 = vsel %vm138, %v1962, 0
    %1967 = vmatprep.subr.mxu0 0.0
    %1968 = vmatpush1.msra.mxu0 0.0
    %1969 = vmatprep.subr.mxu0 0.0
    %1970 = vmatpush1.msra.mxu0 0.0
    %1971 = vmatprep.subr.mxu0 0.0
    %1972 = vmatpush1.msra.mxu0 0.0
    %1973 = vmatprep.subr.mxu0 0.0
    %1974 = vmatpush1.msra.mxu0 0.0
    %1975 = vmatprep.subr.mxu0 0.0
    %1976 = vmatpush1.msra.mxu0 0.0
    %1977 = vmatprep.subr.mxu0 0.0
    %1978 = vmatpush1.msra.mxu0 0.0
    %1979 = vmatprep.subr.mxu0 0.0
    %1980 = vmatpush1.msra.mxu0 0.0
    %1981 = vmatprep.subr.mxu0 0.0
    %1982 = vmatpush1.msra.mxu0 0.0
    %1983 = vmatprep.subr.mxu0 0.0
    %1984 = vmatpush1.msra.mxu0 %v47
    %1985 = vmatprep.subr.mxu0 0.0
    %1986 = vmatpush1.msra.mxu0 %v46
    %1987 = vmatprep.subr.mxu0 0.0
    %1988 = vmatpush1.msra.mxu0 %v45
    %1989 = vmatprep.subr.mxu0 0.0
    %1990 = vmatpush1.msra.mxu0 %v44
    %1991 = vmatprep.subr.mxu0 0.0
    %1992 = vmatpush1.msra.mxu0 %v43
    %1993 = vmatprep.subr.mxu0 0.0
    %1994 = vmatpush1.msra.mxu0 %v42
    %1995 = vmatprep.subr.mxu0 0.0
    %1996 = vmatpush1.msra.mxu0 %v41
    %1997 = vmatprep.subr.mxu0 0.0
    %1998 = vmatpush1.msra.mxu0 %v40
    %1999 = vmatprep.subr.mxu0 0.0
    %2000 = vmatpush2.msra.mxu0 0.0
    %2001 = vmatprep.subr.mxu0 0.0
    %2002 = vmatpush2.msra.mxu0 0.0
    %2003 = vmatprep.subr.mxu0 0.0
    %2004 = vmatpush2.msra.mxu0 0.0
    %2005 = vmatprep.subr.mxu0 0.0
    %2006 = vmatpush2.msra.mxu0 0.0
    %2007 = vmatprep.subr.mxu0 0.0
    %2008 = vmatpush2.msra.mxu0 0.0
    %2009 = vmatprep.subr.mxu0 0.0
    %2010 = vmatpush2.msra.mxu0 0.0
    %2011 = vmatprep.subr.mxu0 0.0
    %2012 = vmatpush2.msra.mxu0 0.0
    %2013 = vmatprep.subr.mxu0 0.0
    %2014 = vmatpush2.msra.mxu0 0.0
    %2015 = vmatprep.subr.mxu0 0.0
    %2016 = vmatpush2.msra.mxu0 0.0
    %2017 = vmatprep.subr.mxu0 0.0
    %2018 = vmatpush2.msra.mxu0 0.0
    %2019 = vmatprep.subr.mxu0 0.0
    %2020 = vmatpush2.msra.mxu0 0.0
    %2021 = vmatprep.subr.mxu0 0.0
    %2022 = vmatpush2.msra.mxu0 0.0
    %2023 = vmatprep.subr.mxu0 0.0
    %2024 = vmatpush2.msra.mxu0 0.0
    %2025 = vmatprep.subr.mxu0 0.0
    %2026 = vmatpush2.msra.mxu0 0.0
    %2027 = vmatprep.subr.mxu0 0.0
    %2028 = vmatpush2.msra.mxu0 0.0
    %2029 = vmatprep.subr.mxu0 0.0
    %2030 = vmatpush2.msra.mxu0 0.0
    %2031 = vmatprep.mubr.f32.mxu0 0.0
    %2032 = vmatmul.mubr.f32.gmra.mxu0 %v1965
    %v2033 = vpop.f32.mrf.mxu0
    %v2034 = vadd.f32 0.0, %v2033
    %v2035 = vpop.f32.mrf.mxu0
    %2036 = vdwg.mxu0
    %v2037 = vadd.f32 %v135, %v2034
    %v2038 = vtanh.pop %v2037
    %2039 = vst.msk [vmem:[#allocation2 + $0x60] sm:$0xf] %vm214, %v2038
    %v2041 = vsel %vm138, %v2038, 0
    %2043 = vmatprep.subr.mxu0 0.0
    %2044 = vmatpush1.msra.mxu0 0.0
    %2045 = vmatprep.subr.mxu0 0.0
    %2046 = vmatpush1.msra.mxu0 0.0
    %2047 = vmatprep.subr.mxu0 0.0
    %2048 = vmatpush1.msra.mxu0 0.0
    %2049 = vmatprep.subr.mxu0 0.0
    %2050 = vmatpush1.msra.mxu0 0.0
    %2051 = vmatprep.subr.mxu0 0.0
    %2052 = vmatpush1.msra.mxu0 0.0
    %2053 = vmatprep.subr.mxu0 0.0
    %2054 = vmatpush1.msra.mxu0 0.0
    %2055 = vmatprep.subr.mxu0 0.0
    %2056 = vmatpush1.msra.mxu0 0.0
    %2057 = vmatprep.subr.mxu0 0.0
    %2058 = vmatpush1.msra.mxu0 0.0
    %2059 = vmatprep.subr.mxu0 0.0
    %2060 = vmatpush1.msra.mxu0 %v47
    %2061 = vmatprep.subr.mxu0 0.0
    %2062 = vmatpush1.msra.mxu0 %v46
    %2063 = vmatprep.subr.mxu0 0.0
    %2064 = vmatpush1.msra.mxu0 %v45
    %2065 = vmatprep.subr.mxu0 0.0
    %2066 = vmatpush1.msra.mxu0 %v44
    %2067 = vmatprep.subr.mxu0 0.0
    %2068 = vmatpush1.msra.mxu0 %v43
    %2069 = vmatprep.subr.mxu0 0.0
    %2070 = vmatpush1.msra.mxu0 %v42
    %2071 = vmatprep.subr.mxu0 0.0
    %2072 = vmatpush1.msra.mxu0 %v41
    %2073 = vmatprep.subr.mxu0 0.0
    %2074 = vmatpush1.msra.mxu0 %v40
    %2075 = vmatprep.subr.mxu0 0.0
    %2076 = vmatpush2.msra.mxu0 0.0
    %2077 = vmatprep.subr.mxu0 0.0
    %2078 = vmatpush2.msra.mxu0 0.0
    %2079 = vmatprep.subr.mxu0 0.0
    %2080 = vmatpush2.msra.mxu0 0.0
    %2081 = vmatprep.subr.mxu0 0.0
    %2082 = vmatpush2.msra.mxu0 0.0
    %2083 = vmatprep.subr.mxu0 0.0
    %2084 = vmatpush2.msra.mxu0 0.0
    %2085 = vmatprep.subr.mxu0 0.0
    %2086 = vmatpush2.msra.mxu0 0.0
    %2087 = vmatprep.subr.mxu0 0.0
    %2088 = vmatpush2.msra.mxu0 0.0
    %2089 = vmatprep.subr.mxu0 0.0
    %2090 = vmatpush2.msra.mxu0 0.0
    %2091 = vmatprep.subr.mxu0 0.0
    %2092 = vmatpush2.msra.mxu0 0.0
    %2093 = vmatprep.subr.mxu0 0.0
    %2094 = vmatpush2.msra.mxu0 0.0
    %2095 = vmatprep.subr.mxu0 0.0
    %2096 = vmatpush2.msra.mxu0 0.0
    %2097 = vmatprep.subr.mxu0 0.0
    %2098 = vmatpush2.msra.mxu0 0.0
    %2099 = vmatprep.subr.mxu0 0.0
    %2100 = vmatpush2.msra.mxu0 0.0
    %2101 = vmatprep.subr.mxu0 0.0
    %2102 = vmatpush2.msra.mxu0 0.0
    %2103 = vmatprep.subr.mxu0 0.0
    %2104 = vmatpush2.msra.mxu0 0.0
    %2105 = vmatprep.subr.mxu0 0.0
    %2106 = vmatpush2.msra.mxu0 0.0
    %2107 = vmatprep.mubr.f32.mxu0 0.0
    %2108 = vmatmul.mubr.f32.gmra.mxu0 %v2041
    %v2109 = vpop.f32.mrf.mxu0
    %v2110 = vadd.f32 0.0, %v2109
    %v2111 = vpop.f32.mrf.mxu0
    %2112 = vdwg.mxu0
    %v2113 = vadd.f32 %v135, %v2110
    %v2114 = vtanh.pop %v2113
    %2115 = vst.msk [vmem:[#allocation2 + $0x64] sm:$0xf] %vm214, %v2114
    %v2117 = vsel %vm138, %v2114, 0
    %2119 = vmatprep.subr.mxu0 0.0
    %2120 = vmatpush1.msra.mxu0 0.0
    %2121 = vmatprep.subr.mxu0 0.0
    %2122 = vmatpush1.msra.mxu0 0.0
    %2123 = vmatprep.subr.mxu0 0.0
    %2124 = vmatpush1.msra.mxu0 0.0
    %2125 = vmatprep.subr.mxu0 0.0
    %2126 = vmatpush1.msra.mxu0 0.0
    %2127 = vmatprep.subr.mxu0 0.0
    %2128 = vmatpush1.msra.mxu0 0.0
    %2129 = vmatprep.subr.mxu0 0.0
    %2130 = vmatpush1.msra.mxu0 0.0
    %2131 = vmatprep.subr.mxu0 0.0
    %2132 = vmatpush1.msra.mxu0 0.0
    %2133 = vmatprep.subr.mxu0 0.0
    %2134 = vmatpush1.msra.mxu0 0.0
    %2135 = vmatprep.subr.mxu0 0.0
    %2136 = vmatpush1.msra.mxu0 %v47
    %2137 = vmatprep.subr.mxu0 0.0
    %2138 = vmatpush1.msra.mxu0 %v46
    %2139 = vmatprep.subr.mxu0 0.0
    %2140 = vmatpush1.msra.mxu0 %v45
    %2141 = vmatprep.subr.mxu0 0.0
    %2142 = vmatpush1.msra.mxu0 %v44
    %2143 = vmatprep.subr.mxu0 0.0
    %2144 = vmatpush1.msra.mxu0 %v43
    %2145 = vmatprep.subr.mxu0 0.0
    %2146 = vmatpush1.msra.mxu0 %v42
    %2147 = vmatprep.subr.mxu0 0.0
    %2148 = vmatpush1.msra.mxu0 %v41
    %2149 = vmatprep.subr.mxu0 0.0
    %2150 = vmatpush1.msra.mxu0 %v40
    %2151 = vmatprep.subr.mxu0 0.0
    %2152 = vmatpush2.msra.mxu0 0.0
    %2153 = vmatprep.subr.mxu0 0.0
    %2154 = vmatpush2.msra.mxu0 0.0
    %2155 = vmatprep.subr.mxu0 0.0
    %2156 = vmatpush2.msra.mxu0 0.0
    %2157 = vmatprep.subr.mxu0 0.0
    %2158 = vmatpush2.msra.mxu0 0.0
    %2159 = vmatprep.subr.mxu0 0.0
    %2160 = vmatpush2.msra.mxu0 0.0
    %2161 = vmatprep.subr.mxu0 0.0
    %2162 = vmatpush2.msra.mxu0 0.0
    %2163 = vmatprep.subr.mxu0 0.0
    %2164 = vmatpush2.msra.mxu0 0.0
    %2165 = vmatprep.subr.mxu0 0.0
    %2166 = vmatpush2.msra.mxu0 0.0
    %2167 = vmatprep.subr.mxu0 0.0
    %2168 = vmatpush2.msra.mxu0 0.0
    %2169 = vmatprep.subr.mxu0 0.0
    %2170 = vmatpush2.msra.mxu0 0.0
    %2171 = vmatprep.subr.mxu0 0.0
    %2172 = vmatpush2.msra.mxu0 0.0
    %2173 = vmatprep.subr.mxu0 0.0
    %2174 = vmatpush2.msra.mxu0 0.0
    %2175 = vmatprep.subr.mxu0 0.0
    %2176 = vmatpush2.msra.mxu0 0.0
    %2177 = vmatprep.subr.mxu0 0.0
    %2178 = vmatpush2.msra.mxu0 0.0
    %2179 = vmatprep.subr.mxu0 0.0
    %2180 = vmatpush2.msra.mxu0 0.0
    %2181 = vmatprep.subr.mxu0 0.0
    %2182 = vmatpush2.msra.mxu0 0.0
    %2183 = vmatprep.mubr.f32.mxu0 0.0
    %2184 = vmatmul.mubr.f32.gmra.mxu0 %v2117
    %v2185 = vpop.f32.mrf.mxu0
    %v2186 = vadd.f32 0.0, %v2185
    %v2187 = vpop.f32.mrf.mxu0
    %2188 = vdwg.mxu0
    %v2189 = vadd.f32 %v135, %v2186
    %v2190 = vtanh.pop %v2189
    %2191 = vst.msk [vmem:[#allocation2 + $0x68] sm:$0xf] %vm214, %v2190
    %v2193 = vsel %vm138, %v2190, 0
    %2195 = vmatprep.subr.mxu0 0.0
    %2196 = vmatpush1.msra.mxu0 0.0
    %2197 = vmatprep.subr.mxu0 0.0
    %2198 = vmatpush1.msra.mxu0 0.0
    %2199 = vmatprep.subr.mxu0 0.0
    %2200 = vmatpush1.msra.mxu0 0.0
    %2201 = vmatprep.subr.mxu0 0.0
    %2202 = vmatpush1.msra.mxu0 0.0
    %2203 = vmatprep.subr.mxu0 0.0
    %2204 = vmatpush1.msra.mxu0 0.0
    %2205 = vmatprep.subr.mxu0 0.0
    %2206 = vmatpush1.msra.mxu0 0.0
    %2207 = vmatprep.subr.mxu0 0.0
    %2208 = vmatpush1.msra.mxu0 0.0
    %2209 = vmatprep.subr.mxu0 0.0
    %2210 = vmatpush1.msra.mxu0 0.0
    %2211 = vmatprep.subr.mxu0 0.0
    %2212 = vmatpush1.msra.mxu0 %v47
    %2213 = vmatprep.subr.mxu0 0.0
    %2214 = vmatpush1.msra.mxu0 %v46
    %2215 = vmatprep.subr.mxu0 0.0
    %2216 = vmatpush1.msra.mxu0 %v45
    %2217 = vmatprep.subr.mxu0 0.0
    %2218 = vmatpush1.msra.mxu0 %v44
    %2219 = vmatprep.subr.mxu0 0.0
    %2220 = vmatpush1.msra.mxu0 %v43
    %2221 = vmatprep.subr.mxu0 0.0
    %2222 = vmatpush1.msra.mxu0 %v42
    %2223 = vmatprep.subr.mxu0 0.0
    %2224 = vmatpush1.msra.mxu0 %v41
    %2225 = vmatprep.subr.mxu0 0.0
    %2226 = vmatpush1.msra.mxu0 %v40
    %2227 = vmatprep.subr.mxu0 0.0
    %2228 = vmatpush2.msra.mxu0 0.0
    %2229 = vmatprep.subr.mxu0 0.0
    %2230 = vmatpush2.msra.mxu0 0.0
    %2231 = vmatprep.subr.mxu0 0.0
    %2232 = vmatpush2.msra.mxu0 0.0
    %2233 = vmatprep.subr.mxu0 0.0
    %2234 = vmatpush2.msra.mxu0 0.0
    %2235 = vmatprep.subr.mxu0 0.0
    %2236 = vmatpush2.msra.mxu0 0.0
    %2237 = vmatprep.subr.mxu0 0.0
    %2238 = vmatpush2.msra.mxu0 0.0
    %2239 = vmatprep.subr.mxu0 0.0
    %2240 = vmatpush2.msra.mxu0 0.0
    %2241 = vmatprep.subr.mxu0 0.0
    %2242 = vmatpush2.msra.mxu0 0.0
    %2243 = vmatprep.subr.mxu0 0.0
    %2244 = vmatpush2.msra.mxu0 0.0
    %2245 = vmatprep.subr.mxu0 0.0
    %2246 = vmatpush2.msra.mxu0 0.0
    %2247 = vmatprep.subr.mxu0 0.0
    %2248 = vmatpush2.msra.mxu0 0.0
    %2249 = vmatprep.subr.mxu0 0.0
    %2250 = vmatpush2.msra.mxu0 0.0
    %2251 = vmatprep.subr.mxu0 0.0
    %2252 = vmatpush2.msra.mxu0 0.0
    %2253 = vmatprep.subr.mxu0 0.0
    %2254 = vmatpush2.msra.mxu0 0.0
    %2255 = vmatprep.subr.mxu0 0.0
    %2256 = vmatpush2.msra.mxu0 0.0
    %2257 = vmatprep.subr.mxu0 0.0
    %2258 = vmatpush2.msra.mxu0 0.0
    %2259 = vmatprep.mubr.f32.mxu0 0.0
    %2260 = vmatmul.mubr.f32.gmra.mxu0 %v2193
    %v2261 = vpop.f32.mrf.mxu0
    %v2262 = vadd.f32 0.0, %v2261
    %v2263 = vpop.f32.mrf.mxu0
    %2264 = vdwg.mxu0
    %v2265 = vadd.f32 %v135, %v2262
    %v2266 = vtanh.pop %v2265
    %2267 = vst.msk [vmem:[#allocation2 + $0x6c] sm:$0xf] %vm214, %v2266
    %v2269 = vsel %vm138, %v2266, 0
    %2271 = vmatprep.subr.mxu0 0.0
    %2272 = vmatpush1.msra.mxu0 0.0
    %2273 = vmatprep.subr.mxu0 0.0
    %2274 = vmatpush1.msra.mxu0 0.0
    %2275 = vmatprep.subr.mxu0 0.0
    %2276 = vmatpush1.msra.mxu0 0.0
    %2277 = vmatprep.subr.mxu0 0.0
    %2278 = vmatpush1.msra.mxu0 0.0
    %2279 = vmatprep.subr.mxu0 0.0
    %2280 = vmatpush1.msra.mxu0 0.0
    %2281 = vmatprep.subr.mxu0 0.0
    %2282 = vmatpush1.msra.mxu0 0.0
    %2283 = vmatprep.subr.mxu0 0.0
    %2284 = vmatpush1.msra.mxu0 0.0
    %2285 = vmatprep.subr.mxu0 0.0
    %2286 = vmatpush1.msra.mxu0 0.0
    %2287 = vmatprep.subr.mxu0 0.0
    %2288 = vmatpush1.msra.mxu0 %v47
    %2289 = vmatprep.subr.mxu0 0.0
    %2290 = vmatpush1.msra.mxu0 %v46
    %2291 = vmatprep.subr.mxu0 0.0
    %2292 = vmatpush1.msra.mxu0 %v45
    %2293 = vmatprep.subr.mxu0 0.0
    %2294 = vmatpush1.msra.mxu0 %v44
    %2295 = vmatprep.subr.mxu0 0.0
    %2296 = vmatpush1.msra.mxu0 %v43
    %2297 = vmatprep.subr.mxu0 0.0
    %2298 = vmatpush1.msra.mxu0 %v42
    %2299 = vmatprep.subr.mxu0 0.0
    %2300 = vmatpush1.msra.mxu0 %v41
    %2301 = vmatprep.subr.mxu0 0.0
    %2302 = vmatpush1.msra.mxu0 %v40
    %2303 = vmatprep.subr.mxu0 0.0
    %2304 = vmatpush2.msra.mxu0 0.0
    %2305 = vmatprep.subr.mxu0 0.0
    %2306 = vmatpush2.msra.mxu0 0.0
    %2307 = vmatprep.subr.mxu0 0.0
    %2308 = vmatpush2.msra.mxu0 0.0
    %2309 = vmatprep.subr.mxu0 0.0
    %2310 = vmatpush2.msra.mxu0 0.0
    %2311 = vmatprep.subr.mxu0 0.0
    %2312 = vmatpush2.msra.mxu0 0.0
    %2313 = vmatprep.subr.mxu0 0.0
    %2314 = vmatpush2.msra.mxu0 0.0
    %2315 = vmatprep.subr.mxu0 0.0
    %2316 = vmatpush2.msra.mxu0 0.0
    %2317 = vmatprep.subr.mxu0 0.0
    %2318 = vmatpush2.msra.mxu0 0.0
    %2319 = vmatprep.subr.mxu0 0.0
    %2320 = vmatpush2.msra.mxu0 0.0
    %2321 = vmatprep.subr.mxu0 0.0
    %2322 = vmatpush2.msra.mxu0 0.0
    %2323 = vmatprep.subr.mxu0 0.0
    %2324 = vmatpush2.msra.mxu0 0.0
    %2325 = vmatprep.subr.mxu0 0.0
    %2326 = vmatpush2.msra.mxu0 0.0
    %2327 = vmatprep.subr.mxu0 0.0
    %2328 = vmatpush2.msra.mxu0 0.0
    %2329 = vmatprep.subr.mxu0 0.0
    %2330 = vmatpush2.msra.mxu0 0.0
    %2331 = vmatprep.subr.mxu0 0.0
    %2332 = vmatpush2.msra.mxu0 0.0
    %2333 = vmatprep.subr.mxu0 0.0
    %2334 = vmatpush2.msra.mxu0 0.0
    %2335 = vmatprep.mubr.f32.mxu0 0.0
    %2336 = vmatmul.mubr.f32.gmra.mxu0 %v2269
    %v2337 = vpop.f32.mrf.mxu0
    %v2338 = vadd.f32 0.0, %v2337
    %v2339 = vpop.f32.mrf.mxu0
    %2340 = vdwg.mxu0
    %v2341 = vadd.f32 %v135, %v2338
    %v2342 = vtanh.pop %v2341
    %2343 = vst.msk [vmem:[#allocation2 + $0x70] sm:$0xf] %vm214, %v2342
    %v2345 = vsel %vm138, %v2342, 0
    %2347 = vmatprep.subr.mxu0 0.0
    %2348 = vmatpush1.msra.mxu0 0.0
    %2349 = vmatprep.subr.mxu0 0.0
    %2350 = vmatpush1.msra.mxu0 0.0
    %2351 = vmatprep.subr.mxu0 0.0
    %2352 = vmatpush1.msra.mxu0 0.0
    %2353 = vmatprep.subr.mxu0 0.0
    %2354 = vmatpush1.msra.mxu0 0.0
    %2355 = vmatprep.subr.mxu0 0.0
    %2356 = vmatpush1.msra.mxu0 0.0
    %2357 = vmatprep.subr.mxu0 0.0
    %2358 = vmatpush1.msra.mxu0 0.0
    %2359 = vmatprep.subr.mxu0 0.0
    %2360 = vmatpush1.msra.mxu0 0.0
    %2361 = vmatprep.subr.mxu0 0.0
    %2362 = vmatpush1.msra.mxu0 0.0
    %2363 = vmatprep.subr.mxu0 0.0
    %2364 = vmatpush1.msra.mxu0 %v47
    %2365 = vmatprep.subr.mxu0 0.0
    %2366 = vmatpush1.msra.mxu0 %v46
    %2367 = vmatprep.subr.mxu0 0.0
    %2368 = vmatpush1.msra.mxu0 %v45
    %2369 = vmatprep.subr.mxu0 0.0
    %2370 = vmatpush1.msra.mxu0 %v44
    %2371 = vmatprep.subr.mxu0 0.0
    %2372 = vmatpush1.msra.mxu0 %v43
    %2373 = vmatprep.subr.mxu0 0.0
    %2374 = vmatpush1.msra.mxu0 %v42
    %2375 = vmatprep.subr.mxu0 0.0
    %2376 = vmatpush1.msra.mxu0 %v41
    %2377 = vmatprep.subr.mxu0 0.0
    %2378 = vmatpush1.msra.mxu0 %v40
    %2379 = vmatprep.subr.mxu0 0.0
    %2380 = vmatpush2.msra.mxu0 0.0
    %2381 = vmatprep.subr.mxu0 0.0
    %2382 = vmatpush2.msra.mxu0 0.0
    %2383 = vmatprep.subr.mxu0 0.0
    %2384 = vmatpush2.msra.mxu0 0.0
    %2385 = vmatprep.subr.mxu0 0.0
    %2386 = vmatpush2.msra.mxu0 0.0
    %2387 = vmatprep.subr.mxu0 0.0
    %2388 = vmatpush2.msra.mxu0 0.0
    %2389 = vmatprep.subr.mxu0 0.0
    %2390 = vmatpush2.msra.mxu0 0.0
    %2391 = vmatprep.subr.mxu0 0.0
    %2392 = vmatpush2.msra.mxu0 0.0
    %2393 = vmatprep.subr.mxu0 0.0
    %2394 = vmatpush2.msra.mxu0 0.0
    %2395 = vmatprep.subr.mxu0 0.0
    %2396 = vmatpush2.msra.mxu0 0.0
    %2397 = vmatprep.subr.mxu0 0.0
    %2398 = vmatpush2.msra.mxu0 0.0
    %2399 = vmatprep.subr.mxu0 0.0
    %2400 = vmatpush2.msra.mxu0 0.0
    %2401 = vmatprep.subr.mxu0 0.0
    %2402 = vmatpush2.msra.mxu0 0.0
    %2403 = vmatprep.subr.mxu0 0.0
    %2404 = vmatpush2.msra.mxu0 0.0
    %2405 = vmatprep.subr.mxu0 0.0
    %2406 = vmatpush2.msra.mxu0 0.0
    %2407 = vmatprep.subr.mxu0 0.0
    %2408 = vmatpush2.msra.mxu0 0.0
    %2409 = vmatprep.subr.mxu0 0.0
    %2410 = vmatpush2.msra.mxu0 0.0
    %2411 = vmatprep.mubr.f32.mxu0 0.0
    %2412 = vmatmul.mubr.f32.gmra.mxu0 %v2345
    %v2413 = vpop.f32.mrf.mxu0
    %v2414 = vadd.f32 0.0, %v2413
    %v2415 = vpop.f32.mrf.mxu0
    %2416 = vdwg.mxu0
    %v2417 = vadd.f32 %v135, %v2414
    %v2418 = vtanh.pop %v2417
    %2419 = vst.msk [vmem:[#allocation2 + $0x74] sm:$0xf] %vm214, %v2418
    %v2420 = vld [vmem:[#allocation2] sm:$0xff]
    %v2421 = vld [vmem:[#allocation2 + $0x8] sm:$0xff]
    %v2422 = vld [vmem:[#allocation2 + $0x10] sm:$0xff]
    %v2423 = vld [vmem:[#allocation2 + $0x18] sm:$0xff]
    %v2424 = vld [vmem:[#allocation2 + $0x20] sm:$0xff]
    %v2425 = vld [vmem:[#allocation2 + $0x28] sm:$0xff]
    %v2426 = vld [vmem:[#allocation2 + $0x30] sm:$0xff]
    %v2427 = vld [vmem:[#allocation2 + $0x38] sm:$0xff]
    %v2428 = vld [vmem:[#allocation2 + $0x40] sm:$0xff]
    %v2429 = vld [vmem:[#allocation2 + $0x48] sm:$0xff]
    %v2430 = vld [vmem:[#allocation2 + $0x50] sm:$0xff]
    %v2431 = vld [vmem:[#allocation2 + $0x58] sm:$0xff]
    %v2432 = vld [vmem:[#allocation2 + $0x60] sm:$0xff]
    %v2433 = vld [vmem:[#allocation2 + $0x68] sm:$0xff]
    %v2434 = vld [vmem:[#allocation2 + $0x70] sm:$0xff]
    %v2436 = vlaneseq
    %v2437 = vshrl.u32 %v2436, 7
    %v2438 = vsub.s32 0, %v2437
    %v2439 = vrot.slane %v57, %v2438
    %v2442 = vsel %vm138, %v2420, 0
    %v2445 = vsel %vm138, %v2421, 0
    %v2448 = vsel %vm138, %v2422, 0
    %v2451 = vsel %vm138, %v2423, 0
    %v2454 = vsel %vm138, %v2424, 0
    %v2457 = vsel %vm138, %v2425, 0
    %v2460 = vsel %vm138, %v2426, 0
    %v2463 = vsel %vm138, %v2427, 0
    %v2466 = vsel %vm138, %v2428, 0
    %v2469 = vsel %vm138, %v2429, 0
    %v2472 = vsel %vm138, %v2430, 0
    %v2475 = vsel %vm138, %v2431, 0
    %v2478 = vsel %vm138, %v2432, 0
    %v2481 = vsel %vm138, %v2433, 0
    %v2484 = vsel %vm138, %v2434, 0
    %2486 = vmatprep.subr.mxu0 0.0
    %2487 = vmatpush1.msra.mxu0 0.0
    %2488 = vmatprep.subr.mxu0 0.0
    %2489 = vmatpush1.msra.mxu0 0.0
    %2490 = vmatprep.subr.mxu0 0.0
    %2491 = vmatpush1.msra.mxu0 0.0
    %2492 = vmatprep.subr.mxu0 0.0
    %2493 = vmatpush1.msra.mxu0 0.0
    %2494 = vmatprep.subr.mxu0 0.0
    %2495 = vmatpush1.msra.mxu0 0.0
    %2496 = vmatprep.subr.mxu0 0.0
    %2497 = vmatpush1.msra.mxu0 0.0
    %2498 = vmatprep.subr.mxu0 0.0
    %2499 = vmatpush1.msra.mxu0 0.0
    %2500 = vmatprep.subr.mxu0 0.0
    %2501 = vmatpush1.msra.mxu0 0.0
    %2502 = vmatprep.subr.mxu0 0.0
    %2503 = vmatpush1.msra.mxu0 %v56
    %2504 = vmatprep.subr.mxu0 0.0
    %2505 = vmatpush1.msra.mxu0 %v55
    %2506 = vmatprep.subr.mxu0 0.0
    %2507 = vmatpush1.msra.mxu0 %v54
    %2508 = vmatprep.subr.mxu0 0.0
    %2509 = vmatpush1.msra.mxu0 %v53
    %2510 = vmatprep.subr.mxu0 0.0
    %2511 = vmatpush1.msra.mxu0 %v52
    %2512 = vmatprep.subr.mxu0 0.0
    %2513 = vmatpush1.msra.mxu0 %v51
    %2514 = vmatprep.subr.mxu0 0.0
    %2515 = vmatpush1.msra.mxu0 %v50
    %2516 = vmatprep.subr.mxu0 0.0
    %2517 = vmatpush1.msra.mxu0 %v49
    %2518 = vmatprep.subr.mxu0 0.0
    %2519 = vmatpush2.msra.mxu0 0.0
    %2520 = vmatprep.subr.mxu0 0.0
    %2521 = vmatpush2.msra.mxu0 0.0
    %2522 = vmatprep.subr.mxu0 0.0
    %2523 = vmatpush2.msra.mxu0 0.0
    %2524 = vmatprep.subr.mxu0 0.0
    %2525 = vmatpush2.msra.mxu0 0.0
    %2526 = vmatprep.subr.mxu0 0.0
    %2527 = vmatpush2.msra.mxu0 0.0
    %2528 = vmatprep.subr.mxu0 0.0
    %2529 = vmatpush2.msra.mxu0 0.0
    %2530 = vmatprep.subr.mxu0 0.0
    %2531 = vmatpush2.msra.mxu0 0.0
    %2532 = vmatprep.subr.mxu0 0.0
    %2533 = vmatpush2.msra.mxu0 0.0
    %2534 = vmatprep.subr.mxu0 0.0
    %2535 = vmatpush2.msra.mxu0 0.0
    %2536 = vmatprep.subr.mxu0 0.0
    %2537 = vmatpush2.msra.mxu0 0.0
    %2538 = vmatprep.subr.mxu0 0.0
    %2539 = vmatpush2.msra.mxu0 0.0
    %2540 = vmatprep.subr.mxu0 0.0
    %2541 = vmatpush2.msra.mxu0 0.0
    %2542 = vmatprep.subr.mxu0 0.0
    %2543 = vmatpush2.msra.mxu0 0.0
    %2544 = vmatprep.subr.mxu0 0.0
    %2545 = vmatpush2.msra.mxu0 0.0
    %2546 = vmatprep.subr.mxu0 0.0
    %2547 = vmatpush2.msra.mxu0 0.0
    %2548 = vmatprep.subr.mxu0 0.0
    %2549 = vmatpush2.msra.mxu0 0.0
    %2550 = vmatprep.mubr.f32.mxu0 0.0
    %2551 = vmatmul.mubr.f32.gmra.mxu0 %v2442
    %v2552 = vpop.f32.mrf.mxu0
    %v2553 = vadd.f32 %v2439, %v2552
    %v2554 = vpop.f32.mrf.mxu0
    %2555 = vmatprep.mubr.f32.mxu0 0.0
    %2556 = vmatmul.mubr.f32.gmra.mxu0 %v2445
    %v2557 = vpop.f32.mrf.mxu0
    %v2558 = vadd.f32 %v2439, %v2557
    %v2559 = vpop.f32.mrf.mxu0
    %2560 = vmatprep.mubr.f32.mxu0 0.0
    %2561 = vmatmul.mubr.f32.gmra.mxu0 %v2448
    %v2562 = vpop.f32.mrf.mxu0
    %v2563 = vadd.f32 %v2439, %v2562
    %v2564 = vpop.f32.mrf.mxu0
    %2565 = vmatprep.mubr.f32.mxu0 0.0
    %2566 = vmatmul.mubr.f32.gmra.mxu0 %v2451
    %v2567 = vpop.f32.mrf.mxu0
    %v2568 = vadd.f32 %v2439, %v2567
    %v2569 = vpop.f32.mrf.mxu0
    %2570 = vmatprep.mubr.f32.mxu0 0.0
    %2571 = vmatmul.mubr.f32.gmra.mxu0 %v2454
    %v2572 = vpop.f32.mrf.mxu0
    %v2573 = vadd.f32 %v2439, %v2572
    %v2574 = vpop.f32.mrf.mxu0
    %2575 = vmatprep.mubr.f32.mxu0 0.0
    %2576 = vmatmul.mubr.f32.gmra.mxu0 %v2457
    %v2577 = vpop.f32.mrf.mxu0
    %v2578 = vadd.f32 %v2439, %v2577
    %v2579 = vpop.f32.mrf.mxu0
    %2580 = vmatprep.mubr.f32.mxu0 0.0
    %2581 = vmatmul.mubr.f32.gmra.mxu0 %v2460
    %v2582 = vpop.f32.mrf.mxu0
    %v2583 = vadd.f32 %v2439, %v2582
    %v2584 = vpop.f32.mrf.mxu0
    %2585 = vmatprep.mubr.f32.mxu0 0.0
    %2586 = vmatmul.mubr.f32.gmra.mxu0 %v2463
    %v2587 = vpop.f32.mrf.mxu0
    %v2588 = vadd.f32 %v2439, %v2587
    %v2589 = vpop.f32.mrf.mxu0
    %2590 = vmatprep.mubr.f32.mxu0 0.0
    %2591 = vmatmul.mubr.f32.gmra.mxu0 %v2466
    %v2592 = vpop.f32.mrf.mxu0
    %v2593 = vadd.f32 %v2439, %v2592
    %v2594 = vpop.f32.mrf.mxu0
    %2595 = vmatprep.mubr.f32.mxu0 0.0
    %2596 = vmatmul.mubr.f32.gmra.mxu0 %v2469
    %v2597 = vpop.f32.mrf.mxu0
    %v2598 = vadd.f32 %v2439, %v2597
    %v2599 = vpop.f32.mrf.mxu0
    %2600 = vmatprep.mubr.f32.mxu0 0.0
    %2601 = vmatmul.mubr.f32.gmra.mxu0 %v2472
    %v2602 = vpop.f32.mrf.mxu0
    %v2603 = vadd.f32 %v2439, %v2602
    %v2604 = vpop.f32.mrf.mxu0
    %2605 = vmatprep.mubr.f32.mxu0 0.0
    %2606 = vmatmul.mubr.f32.gmra.mxu0 %v2475
    %v2607 = vpop.f32.mrf.mxu0
    %v2608 = vadd.f32 %v2439, %v2607
    %v2609 = vpop.f32.mrf.mxu0
    %2610 = vmatprep.mubr.f32.mxu0 0.0
    %2611 = vmatmul.mubr.f32.gmra.mxu0 %v2478
    %v2612 = vpop.f32.mrf.mxu0
    %v2613 = vadd.f32 %v2439, %v2612
    %v2614 = vpop.f32.mrf.mxu0
    %2615 = vmatprep.mubr.f32.mxu0 0.0
    %2616 = vmatmul.mubr.f32.gmra.mxu0 %v2481
    %v2617 = vpop.f32.mrf.mxu0
    %v2618 = vadd.f32 %v2439, %v2617
    %v2619 = vpop.f32.mrf.mxu0
    %2620 = vmatprep.mubr.f32.mxu0 0.0
    %2621 = vmatmul.mubr.f32.gmra.mxu0 %v2484
    %v2622 = vpop.f32.mrf.mxu0
    %v2623 = vadd.f32 %v2439, %v2622
    %v2624 = vpop.f32.mrf.mxu0
    %2625 = vdwg.mxu0
    %vm2626 = vcmask 64512
    %2627 = vst.msk [vmem:[%s6] sm:$0xff] %vm2626, %v2553
    %2628 = vst.msk [vmem:[%s6 + $0x8] sm:$0xff] %vm2626, %v2558
    %2629 = vst.msk [vmem:[%s6 + $0x10] sm:$0xff] %vm2626, %v2563
    %2630 = vst.msk [vmem:[%s6 + $0x18] sm:$0xff] %vm2626, %v2568
    %2631 = vst.msk [vmem:[%s6 + $0x20] sm:$0xff] %vm2626, %v2573
    %2632 = vst.msk [vmem:[%s6 + $0x28] sm:$0xff] %vm2626, %v2578
    %2633 = vst.msk [vmem:[%s6 + $0x30] sm:$0xff] %vm2626, %v2583
    %2634 = vst.msk [vmem:[%s6 + $0x38] sm:$0xff] %vm2626, %v2588
    %2635 = vst.msk [vmem:[%s6 + $0x40] sm:$0xff] %vm2626, %v2593
    %2636 = vst.msk [vmem:[%s6 + $0x48] sm:$0xff] %vm2626, %v2598
    %2637 = vst.msk [vmem:[%s6 + $0x50] sm:$0xff] %vm2626, %v2603
    %2638 = vst.msk [vmem:[%s6 + $0x58] sm:$0xff] %vm2626, %v2608
    %2639 = vst.msk [vmem:[%s6 + $0x60] sm:$0xff] %vm2626, %v2613
    %2640 = vst.msk [vmem:[%s6 + $0x68] sm:$0xff] %vm2626, %v2618
    %2641 = vst.msk [vmem:[%s6 + $0x70] sm:$0xff] %vm2626, %v2623
    // Predicated region
    $region30: #{tpu_custom_call.1} parent=1 // pred_check
      _
    $region31: #{tpu_custom_call.1} parent=1 // pred_check_branch
      %2643 = sbr.rel (0) target = $region33
    $region32: #{tpu_custom_call.1} parent=1 // pred_region
      _
    $region33: #{tpu_custom_call.1} parent=1 // pred_fallthru
      _
    // Predicated region
    $region34: #{tpu_custom_call.1} parent=1 // pred_check
      _
    $region35: #{tpu_custom_call.1} parent=1 // pred_check_branch
      %2645 = sbr.rel (0) target = $region37
    $region36: #{tpu_custom_call.1} parent=1 // pred_region
      _
    $region37: #{tpu_custom_call.1} parent=1 // pred_fallthru
      _
    %2646 = vsyncpa [#allocation4], 1

</llo_original>
